<compile_context>
chip_gen: v7x
topology: tpu7x:2x2x1
jax: 0.10.0
libtpu: 0.0.40
codegen_flags: <defaults>
</compile_context>

<pallas_src>
import functools

import jax
import jax.numpy as jnp
from jax.experimental import pallas as pl
from jax.experimental.pallas import tpu as pltpu

# ---- model hyper-parameters (model_params) ---------------------------------
DIM = 5                       # forced by regression_head input size (see above)
DIM_PAD = 8                   # feature axis zero-padded to one sublane group
DEPTH = 2
HEADS = 2
DIM_HEAD = 4
MLP_DIM = 8
INNER = HEADS * DIM_HEAD      # 8
CONV_C = 32                   # Conv2d(1, 32, (2, 1))
NPOS = DIM - 1                # 4 conv output positions
POOLED = NPOS // 2            # 2  (MaxPool2d((2,1), stride (2,1)))
FLAT = CONV_C * POOLED        # 64
HID = 32                      # regression_head hidden
LN_EPS = 1e-5

# columns of the packed per-layer vector table `tvec` (f32 biases + row mask)
_C_BO, _C_B1, _C_B2, _C_MASK = range(4)


def _gelu_tanh(x):
    return 0.5 * x * (1.0 + jnp.tanh(0.7978845608028654 * (x + 0.044715 * x * x * x)))


def _ln_center(h, mask):
    # h: (DIM_PAD, TB) feature-major, rows DIM..DIM_PAD-1 exactly zero.
    # LN affine (w, b) is folded into the following matmul host-side, so only
    # the centered / scaled value is produced here.  `mask` zeroes the pad rows
    # of the centered value so the variance uses only the DIM real rows.
    mu = jnp.sum(h, axis=0, keepdims=True) * (1.0 / DIM)
    hc = (h - mu) * mask
    var = jnp.sum(hc * hc, axis=0, keepdims=True) * (1.0 / DIM)
    return hc * jax.lax.rsqrt(var + LN_EPS)


# ---------------------------------------------------------------------------
# Pallas kernel: whole TFCNN forward for one batch tile (batch on lanes).
# ---------------------------------------------------------------------------
def tfcnn_kernel(x_ref, tvec_ref, tmat_ref, wconv_ref, cb_ref, hdw_ref, hdv_ref, o_ref):
    bf16 = jnp.bfloat16
    x = x_ref[...].astype(jnp.float32)               # (DIM_PAD, TB); residual stream f32
    mask = tvec_ref[0][:, _C_MASK:_C_MASK + 1]       # (DIM_PAD, 1): 1.0 on the DIM real rows

    # ---- Transformer (pre-norm), seq_len == 1 ------------------------------
    # Softmax over a single key is exactly 1, so attention output == v and the
    # whole block is the affine map x + (Wo@Wv) @ LN(x) + bo; the LN affine is
    # folded into tmat / tvec host-side.
    for l in range(DEPTH):
        vec = tvec_ref[l]                             # (DIM_PAD, 8) f32 bias columns

        hn = _ln_center(x, mask)
        x = x + jnp.dot(tmat_ref[l, 0], hn.astype(bf16),
                        preferred_element_type=jnp.float32) + vec[:, _C_BO:_C_BO + 1]

        hn = _ln_center(x, mask)
        h1 = jnp.dot(tmat_ref[l, 1], hn.astype(bf16),
                     preferred_element_type=jnp.float32) + vec[:, _C_B1:_C_B1 + 1]
        g = _gelu_tanh(h1)                            # f32 elementwise (v5e VPU has no bf16)
        x = x + jnp.dot(tmat_ref[l, 2], g.astype(bf16),
                        preferred_element_type=jnp.float32) + vec[:, _C_B2:_C_B2 + 1]

    # ---- features: Conv2d(1,32,(2,1)) + ReLU + MaxPool2d((2,1),(2,1)) -------
    # One banded matmul; rows ordered [pos0 | pos2 | pos1 | pos3] x 32 channels
    # so the max-pool is a single max of two 64-sublane halves.
    conv = jnp.dot(wconv_ref[...], x.astype(bf16),
                   preferred_element_type=jnp.float32) + cb_ref[...]
    conv = jnp.maximum(conv, 0.0)                                  # (128, TB) f32
    pooled = jnp.maximum(conv[0:FLAT, :], conv[FLAT:2 * FLAT, :])  # (64, TB) f32

    # ---- regression head: Linear(64,32) + ReLU + Linear(32,1) ---------------
    hdv = hdv_ref[...]                                # (32, 8) f32: [h1_b | h2_w | h2_b | pad]
    y = jnp.dot(hdw_ref[...], pooled.astype(bf16),
                preferred_element_type=jnp.float32) + hdv[:, 0:1]
    y = jnp.maximum(y, 0.0)                           # (32, TB)
    out = jnp.sum(hdv[:, 1:2] * y, axis=0, keepdims=True) + hdv[0:1, 2:3]   # (1, TB) f32
    o_ref[...] = out                                  # single real row, lane-dense store


# ---------------------------------------------------------------------------
# Wrapper: batch-tiled pallas_call (batch padded, tiled along the lane axis).
# ---------------------------------------------------------------------------
@functools.partial(jax.jit, static_argnames=("block_b",))
def tfcnn_forward(x, kernel_params, block_b=4096):
    """x: (B, DIM) float32.  Returns (B, 1) float32."""
    assert block_b % 128 == 0, "block_b must be a multiple of 128 (lane width)"
    B = x.shape[0]
    # Clamp the tile for small B so the grid has >= 2 steps (keeps both v7x
    # TensorCores busy under dimension_semantics=('parallel',)).
    half = ((B + 1) // 2 + 127) // 128 * 128
    blk = max(128, min(block_b, half))
    nblk = -(-B // blk)                          # cdiv; pad batch up to a full grid
    B_pad = nblk * blk

    # feature-major, zero-padded bf16 input: batch on the 128-lane axis.
    x_t = jnp.pad(x.astype(jnp.bfloat16).T, ((0, DIM_PAD - DIM), (0, B_pad - B)))

    kp = kernel_params
    out = pl.pallas_call(
        tfcnn_kernel,
        out_shape=jax.ShapeDtypeStruct((1, B_pad), jnp.float32),
        grid=(nblk,),
        in_specs=[
            pl.BlockSpec((DIM_PAD, blk), lambda i: (0, i)),
            # weights: constant block index => stay resident across grid steps
            pl.BlockSpec(kp["tvec"].shape, lambda i: (0, 0, 0)),
            pl.BlockSpec(kp["tmat"].shape, lambda i: (0, 0, 0, 0)),
            pl.BlockSpec(kp["wconv"].shape, lambda i: (0, 0)),
            pl.BlockSpec(kp["cb"].shape, lambda i: (0, 0)),
            pl.BlockSpec(kp["hdw"].shape, lambda i: (0, 0)),
            pl.BlockSpec(kp["hdv"].shape, lambda i: (0, 0)),
        ],
        out_specs=pl.BlockSpec((1, blk), lambda i: (0, i)),
        compiler_params=pltpu.CompilerParams(
            dimension_semantics=("parallel",)),   # shards across v7x TensorCores
    )(x_t, kp["tvec"], kp["tmat"], kp["wconv"], kp["cb"], kp["hdw"], kp["hdv"])

    return out[0, :B].reshape(B, 1)


# ---------------------------------------------------------------------------
# Deterministic parameter init (torch-style layout) + glue to kernel layout.
# LN params are given non-trivial values so the host-side affine fold is
# actually exercised by the correctness check.
# ---------------------------------------------------------------------------
def init_params(key):
    ks = jax.random.split(key, 20)
    nrm = lambda k, shape, s: (s * jax.random.normal(k, shape)).astype(jnp.float32)
    return {
        "ln1_w": 1.0 + nrm(ks[13], (DEPTH, DIM), 0.1),
        "ln1_b": nrm(ks[14], (DEPTH, DIM), 0.05),
        "qkv_w": nrm(ks[0], (DEPTH, 3 * INNER, DIM), DIM ** -0.5),   # to_qkv (no bias)
        "out_w": nrm(ks[1], (DEPTH, DIM, INNER), INNER ** -0.5),
        "out_b": nrm(ks[2], (DEPTH, DIM), 0.02),
        "ln2_w": 1.0 + nrm(ks[15], (DEPTH, DIM), 0.1),
        "ln2_b": nrm(ks[16], (DEPTH, DIM), 0.05),
        "ff1_w": nrm(ks[3], (DEPTH, MLP_DIM, DIM), DIM ** -0.5),
        "ff1_b": nrm(ks[4], (DEPTH, MLP_DIM), 0.02),
        "ff2_w": nrm(ks[5], (DEPTH, DIM, MLP_DIM), MLP_DIM ** -0.5),
        "ff2_b": nrm(ks[6], (DEPTH, DIM), 0.02),
        "conv_w": nrm(ks[7], (CONV_C, 1, 2, 1), 0.5),                # Conv2d(1,32,(2,1))
        "conv_b": nrm(ks[8], (CONV_C,), 0.02),
        "head1_w": nrm(ks[9], (HID, FLAT), FLAT ** -0.5),            # Linear(64,32)
        "head1_b": nrm(ks[10], (HID,), 0.02),
        "head2_w": nrm(ks[11], (1, HID), HID ** -0.5),               # Linear(32,1)
        "head2_b": nrm(ks[12], (1,), 0.02),
    }


def to_kernel_params(tp):
    """Re-pack torch-layout params into the kernel's feature-major packed arrays.

    Matmul weights (tmat / wconv / hdw) are stored as bf16; biases, the row
    mask and the final-reduction params stay f32.
    """
    f32, bf16 = jnp.float32, jnp.bfloat16

    # seq_len == 1 attention fold: only the v chunk of to_qkv matters.
    wv = tp["qkv_w"][:, 2 * INNER:, :]                        # (L, INNER, DIM)
    wvo = jnp.matmul(tp["out_w"], wv)                         # (L, DIM, DIM)

    # Fold LN affine into the following matmul:
    #   attn: (wvo * ln1_w) @ xhat + (out_b + wvo @ ln1_b)
    #   ff1 : (ff1_w * ln2_w) @ xhat + (ff1_b + ff1_w @ ln2_b)
    w_attn = wvo * tp["ln1_w"][:, None, :]
    b_attn = tp["out_b"] + jnp.einsum("lij,lj->li", wvo, tp["ln1_b"])
    w_ff1 = tp["ff1_w"] * tp["ln2_w"][:, None, :]
    b_ff1 = tp["ff1_b"] + jnp.einsum("lij,lj->li", tp["ff1_w"], tp["ln2_b"])

    # per-layer bias columns + real-row mask; pad rows (5..7) of the DIM-sized
    # columns stay exactly zero (required so x's pad rows remain zero).
    tvec = jnp.zeros((DEPTH, DIM_PAD, 8), f32)
    tvec = tvec.at[:, :DIM, _C_BO].set(b_attn)
    tvec = tvec.at[:, :MLP_DIM, _C_B1].set(b_ff1)
    tvec = tvec.at[:, :DIM, _C_B2].set(tp["ff2_b"])
    tvec = tvec.at[:, :DIM, _C_MASK].set(1.0)

    # per-layer matrices, feature-major, zero-padded to (DIM_PAD, DIM_PAD), bf16
    tmat = jnp.zeros((DEPTH, 3, DIM_PAD, DIM_PAD), f32)
    tmat = tmat.at[:, 0, :DIM, :DIM].set(w_attn)
    tmat = tmat.at[:, 1, :MLP_DIM, :DIM].set(w_ff1)
    tmat = tmat.at[:, 2, :DIM, :MLP_DIM].set(tp["ff2_w"])
    tmat = tmat.astype(bf16)

    # banded conv weight, rows = [pos0 | pos2 | pos1 | pos3] x 32 channels, bf16
    cw = tp["conv_w"][:, 0, :, 0]                             # (32, 2)
    wconv = jnp.zeros((NPOS * CONV_C, DIM_PAD), f32)
    for blk, pos in enumerate((0, 2, 1, 3)):
        wconv = wconv.at[blk * CONV_C:(blk + 1) * CONV_C, pos].set(cw[:, 0])
        wconv = wconv.at[blk * CONV_C:(blk + 1) * CONV_C, pos + 1].set(cw[:, 1])
    wconv = wconv.astype(bf16)
    cb = jnp.tile(tp["conv_b"], NPOS).reshape(NPOS * CONV_C, 1).astype(f32)

    # regression head: h1 weight re-ordered so row r = p*32 + c matches the
    # kernel's pooled layout (torch's channel-major .view flatten m = c*2 + p).
    h1w = tp["head1_w"].reshape(HID, CONV_C, POOLED)
    hdw = jnp.transpose(h1w, (0, 2, 1)).reshape(HID, FLAT).astype(bf16)   # (32, 64)
    hdv = jnp.zeros((HID, 8), f32)
    hdv = hdv.at[:, 0].set(tp["head1_b"])
    hdv = hdv.at[:, 1].set(tp["head2_w"][0])
    hdv = hdv.at[0, 2].set(tp["head2_b"][0])

    return {"tvec": tvec, "tmat": tmat, "wconv": wconv, "cb": cb,
            "hdw": hdw, "hdv": hdv}


# ---------------------------------------------------------------------------
# Pure-JAX f32 reference (torch layout, batch-major), used as correctness check.
# ---------------------------------------------------------------------------
def _layernorm_ref(h, w, b):
    mu = jnp.mean(h, axis=-1, keepdims=True)
    var = jnp.mean(jnp.square(h - mu), axis=-1, keepdims=True)
    return (h - mu) * jax.lax.rsqrt(var + LN_EPS) * w + b


def reference_forward(x, tp):
    B = x.shape[0]
    h = x                                                     # (B, DIM); seq_len == 1
    for l in range(DEPTH):
        hn = _layernorm_ref(h, tp["ln1_w"][l], tp["ln1_b"][l])
        qkv = hn @ tp["qkv_w"][l].T                           # (B, 3*INNER)
        v = qkv[:, 2 * INNER:]                                # softmax over 1 key == 1
        h = h + (v @ tp["out_w"][l].T + tp["out_b"][l])
        hn = _layernorm_ref(h, tp["ln2_w"][l], tp["ln2_b"][l])
        ff = _gelu_tanh(hn @ tp["ff1_w"][l].T + tp["ff1_b"][l])
        h = h + (ff @ tp["ff2_w"][l].T + tp["ff2_b"][l])
    # permute(0,2,1).unsqueeze(1) -> NCHW (B,1,DIM,1); conv slides over H = DIM
    cw = tp["conv_w"][:, 0, :, 0]                             # (32, 2)
    feat = jnp.stack([h[:, i:i + 2] @ cw.T + tp["conv_b"] for i in range(NPOS)],
                     axis=2)                                  # (B, 32, 4)
    feat = jnp.maximum(feat, 0.0)
    pooled = jnp.maximum(feat[:, :, 0:2 * POOLED:2], feat[:, :, 1:2 * POOLED:2])
    flat = pooled.reshape(B, -1)                              # channel-major, as .view
    y = jnp.maximum(flat @ tp["head1_w"].T + tp["head1_b"], 0.0)
    return y @ tp["head2_w"].T + tp["head2_b"]


if __name__ == "__main__":
    key = jax.random.PRNGKey(0)
    p_key, x_key = jax.random.split(key)
    tp = init_params(p_key)
    kp = to_kernel_params(tp)

    # B deliberately not a multiple of the tile (exercises the padding path);
    # the wrapper clamps the tile to 512 here so the grid has 2 even steps.
    B = 1000
    x = jax.random.uniform(x_key, (B, DIM), jnp.float32)

    out = jax.block_until_ready(tfcnn_forward(x, kp))
    assert out.shape == (B, 1), out.shape

    ref = reference_forward(x, tp)
    # Tolerance reflects bf16 matmul operands (f32 accumulation); a genuine
    # layout / folding bug produces O(1) errors and still trips this check.
    max_err = float(jnp.max(jnp.abs(out - ref)))
    assert jnp.allclose(out, ref, atol=5e-2, rtol=5e-2), \
        f"kernel/reference mismatch: max abs err {max_err}"

    print("KERNEL_OK")
</pallas_src>

<mosaic_0001>
module attributes {stable_mosaic.version = 11 : i64} {
  func.func @tfcnn_kernel(%arg0: i32, %arg1: memref<8x512xbf16, #tpu.memory_space<vmem>>, %arg2: memref<2x8x8xf32, #tpu.memory_space<vmem>>, %arg3: memref<2x3x8x8xbf16, #tpu.memory_space<vmem>>, %arg4: memref<128x8xbf16, #tpu.memory_space<vmem>>, %arg5: memref<128x1xf32, #tpu.memory_space<vmem>>, %arg6: memref<32x64xbf16, #tpu.memory_space<vmem>>, %arg7: memref<32x8xf32, #tpu.memory_space<vmem>>, %arg8: memref<1x512xf32, #tpu.memory_space<vmem>>) attributes {dimension_semantics = [#tpu.dimension_semantics<parallel>], iteration_bounds = array<i64: 2>, scalar_prefetch = 0 : i64, scratch_operands = 0 : i64, tpu.core_type = #tpu.core_type<tc>, window_params = [{transform_indices = @transform_0, window_bounds = array<i64: 8, 512>}, {pipeline_mode = #tpu.pipeline_mode<synchronous>, transform_indices = @transform_1, window_bounds = array<i64: 2, 8, 8>}, {pipeline_mode = #tpu.pipeline_mode<synchronous>, transform_indices = @transform_2, window_bounds = array<i64: 2, 3, 8, 8>}, {pipeline_mode = #tpu.pipeline_mode<synchronous>, transform_indices = @transform_3, window_bounds = array<i64: 128, 8>}, {pipeline_mode = #tpu.pipeline_mode<synchronous>, transform_indices = @transform_4, window_bounds = array<i64: 128, 1>}, {pipeline_mode = #tpu.pipeline_mode<synchronous>, transform_indices = @transform_5, window_bounds = array<i64: 32, 64>}, {pipeline_mode = #tpu.pipeline_mode<synchronous>, transform_indices = @transform_6, window_bounds = array<i64: 32, 8>}, {transform_indices = @transform_7, window_bounds = array<i64: 1, 512>}]} {
    %c0 = arith.constant 0 : index
    %c0_0 = arith.constant 0 : index
    %0 = vector.load %arg1[%c0, %c0_0] : memref<8x512xbf16, #tpu.memory_space<vmem>>, vector<8x512xbf16>
    %1 = arith.extf %0 : vector<8x512xbf16> to vector<8x512xf32>
    %c0_1 = arith.constant 0 : index
    %c0_2 = arith.constant 0 : index
    %c0_3 = arith.constant 0 : index
    %2 = vector.load %arg2[%c0_1, %c0_2, %c0_3] : memref<2x8x8xf32, #tpu.memory_space<vmem>>, vector<1x8x8xf32>
    %3 = vector.shape_cast %2 : vector<1x8x8xf32> to vector<8x8xf32>
    %4 = vector.extract_strided_slice %3 {offsets = [0, 3], sizes = [8, 1], strides = [1, 1]} : vector<8x8xf32> to vector<8x1xf32>
    %c0_4 = arith.constant 0 : index
    %c0_5 = arith.constant 0 : index
    %c0_6 = arith.constant 0 : index
    %5 = vector.load %arg2[%c0_4, %c0_5, %c0_6] : memref<2x8x8xf32, #tpu.memory_space<vmem>>, vector<1x8x8xf32>
    %6 = vector.shape_cast %5 : vector<1x8x8xf32> to vector<8x8xf32>
    %cst = arith.constant dense<0.000000e+00> : vector<512xf32>
    %7 = vector.multi_reduction <add>, %1, %cst [0] : vector<8x512xf32> to vector<512xf32>
    %8 = vector.shape_cast %7 : vector<512xf32> to vector<1x512xf32>
    %cst_7 = arith.constant 2.000000e-01 : f32
    %9 = vector.broadcast %cst_7 : f32 to vector<1x512xf32>
    %10 = arith.mulf %8, %9 : vector<1x512xf32>
    %11 = vector.broadcast %10 : vector<1x512xf32> to vector<8x512xf32>
    %12 = arith.subf %1, %11 : vector<8x512xf32>
    %13 = vector.broadcast %4 : vector<8x1xf32> to vector<8x512xf32>
    %14 = arith.mulf %12, %13 : vector<8x512xf32>
    %15 = arith.mulf %14, %14 : vector<8x512xf32>
    %cst_8 = arith.constant dense<0.000000e+00> : vector<512xf32>
    %16 = vector.multi_reduction <add>, %15, %cst_8 [0] : vector<8x512xf32> to vector<512xf32>
    %17 = vector.shape_cast %16 : vector<512xf32> to vector<1x512xf32>
    %cst_9 = arith.constant 2.000000e-01 : f32
    %18 = vector.broadcast %cst_9 : f32 to vector<1x512xf32>
    %19 = arith.mulf %17, %18 : vector<1x512xf32>
    %cst_10 = arith.constant 9.99999974E-6 : f32
    %20 = vector.broadcast %cst_10 : f32 to vector<1x512xf32>
    %21 = arith.addf %19, %20 : vector<1x512xf32>
    %22 = math.rsqrt %21 : vector<1x512xf32>
    %23 = vector.broadcast %22 : vector<1x512xf32> to vector<8x512xf32>
    %24 = arith.mulf %14, %23 : vector<8x512xf32>
    %c0_11 = arith.constant 0 : index
    %c0_12 = arith.constant 0 : index
    %c0_13 = arith.constant 0 : index
    %c0_14 = arith.constant 0 : index
    %25 = vector.load %arg3[%c0_11, %c0_12, %c0_13, %c0_14] : memref<2x3x8x8xbf16, #tpu.memory_space<vmem>>, vector<1x1x8x8xbf16>
    %26 = vector.shape_cast %25 : vector<1x1x8x8xbf16> to vector<8x8xbf16>
    %27 = arith.truncf %24 : vector<8x512xf32> to vector<8x512xbf16>
    %cst_15 = arith.constant dense<0.000000e+00> : vector<8x512xf32>
    %28 = tpu.matmul %26, %27, %cst_15 {dimension_numbers = #tpu.dot_dimension_numbers<[1], [0], [0], [1], [0, 0, 1, 1], [], []>} : vector<8x8xbf16>, vector<8x512xbf16>, vector<8x512xf32> -> vector<8x512xf32>
    %29 = arith.addf %1, %28 : vector<8x512xf32>
    %30 = vector.extract_strided_slice %6 {offsets = [0, 0], sizes = [8, 1], strides = [1, 1]} : vector<8x8xf32> to vector<8x1xf32>
    %31 = vector.broadcast %30 : vector<8x1xf32> to vector<8x512xf32>
    %32 = arith.addf %29, %31 : vector<8x512xf32>
    %cst_16 = arith.constant dense<0.000000e+00> : vector<512xf32>
    %33 = vector.multi_reduction <add>, %32, %cst_16 [0] : vector<8x512xf32> to vector<512xf32>
    %34 = vector.shape_cast %33 : vector<512xf32> to vector<1x512xf32>
    %cst_17 = arith.constant 2.000000e-01 : f32
    %35 = vector.broadcast %cst_17 : f32 to vector<1x512xf32>
    %36 = arith.mulf %34, %35 : vector<1x512xf32>
    %37 = vector.broadcast %36 : vector<1x512xf32> to vector<8x512xf32>
    %38 = arith.subf %32, %37 : vector<8x512xf32>
    %39 = vector.broadcast %4 : vector<8x1xf32> to vector<8x512xf32>
    %40 = arith.mulf %38, %39 : vector<8x512xf32>
    %41 = arith.mulf %40, %40 : vector<8x512xf32>
    %cst_18 = arith.constant dense<0.000000e+00> : vector<512xf32>
    %42 = vector.multi_reduction <add>, %41, %cst_18 [0] : vector<8x512xf32> to vector<512xf32>
    %43 = vector.shape_cast %42 : vector<512xf32> to vector<1x512xf32>
    %cst_19 = arith.constant 2.000000e-01 : f32
    %44 = vector.broadcast %cst_19 : f32 to vector<1x512xf32>
    %45 = arith.mulf %43, %44 : vector<1x512xf32>
    %cst_20 = arith.constant 9.99999974E-6 : f32
    %46 = vector.broadcast %cst_20 : f32 to vector<1x512xf32>
    %47 = arith.addf %45, %46 : vector<1x512xf32>
    %48 = math.rsqrt %47 : vector<1x512xf32>
    %49 = vector.broadcast %48 : vector<1x512xf32> to vector<8x512xf32>
    %50 = arith.mulf %40, %49 : vector<8x512xf32>
    %c0_21 = arith.constant 0 : index
    %c1 = arith.constant 1 : index
    %c0_22 = arith.constant 0 : index
    %c0_23 = arith.constant 0 : index
    %51 = vector.load %arg3[%c0_21, %c1, %c0_22, %c0_23] : memref<2x3x8x8xbf16, #tpu.memory_space<vmem>>, vector<1x1x8x8xbf16>
    %52 = vector.shape_cast %51 : vector<1x1x8x8xbf16> to vector<8x8xbf16>
    %53 = arith.truncf %50 : vector<8x512xf32> to vector<8x512xbf16>
    %cst_24 = arith.constant dense<0.000000e+00> : vector<8x512xf32>
    %54 = tpu.matmul %52, %53, %cst_24 {dimension_numbers = #tpu.dot_dimension_numbers<[1], [0], [0], [1], [0, 0, 1, 1], [], []>} : vector<8x8xbf16>, vector<8x512xbf16>, vector<8x512xf32> -> vector<8x512xf32>
    %55 = vector.extract_strided_slice %6 {offsets = [0, 1], sizes = [8, 1], strides = [1, 1]} : vector<8x8xf32> to vector<8x1xf32>
    %56 = vector.broadcast %55 : vector<8x1xf32> to vector<8x512xf32>
    %57 = arith.addf %54, %56 : vector<8x512xf32>
    %cst_25 = arith.constant 5.000000e-01 : f32
    %58 = vector.broadcast %cst_25 : f32 to vector<8x512xf32>
    %59 = arith.mulf %58, %57 : vector<8x512xf32>
    %cst_26 = arith.constant 4.471500e-02 : f32
    %60 = vector.broadcast %cst_26 : f32 to vector<8x512xf32>
    %61 = arith.mulf %60, %57 : vector<8x512xf32>
    %62 = arith.mulf %61, %57 : vector<8x512xf32>
    %63 = arith.mulf %62, %57 : vector<8x512xf32>
    %64 = arith.addf %57, %63 : vector<8x512xf32>
    %cst_27 = arith.constant 0.797884583 : f32
    %65 = vector.broadcast %cst_27 : f32 to vector<8x512xf32>
    %66 = arith.mulf %65, %64 : vector<8x512xf32>
    %67 = math.tanh %66 : vector<8x512xf32>
    %cst_28 = arith.constant 1.000000e+00 : f32
    %68 = vector.broadcast %cst_28 : f32 to vector<8x512xf32>
    %69 = arith.addf %68, %67 : vector<8x512xf32>
    %70 = arith.mulf %59, %69 : vector<8x512xf32>
    %c0_29 = arith.constant 0 : index
    %c2 = arith.constant 2 : index
    %c0_30 = arith.constant 0 : index
    %c0_31 = arith.constant 0 : index
    %71 = vector.load %arg3[%c0_29, %c2, %c0_30, %c0_31] : memref<2x3x8x8xbf16, #tpu.memory_space<vmem>>, vector<1x1x8x8xbf16>
    %72 = vector.shape_cast %71 : vector<1x1x8x8xbf16> to vector<8x8xbf16>
    %73 = arith.truncf %70 : vector<8x512xf32> to vector<8x512xbf16>
    %cst_32 = arith.constant dense<0.000000e+00> : vector<8x512xf32>
    %74 = tpu.matmul %72, %73, %cst_32 {dimension_numbers = #tpu.dot_dimension_numbers<[1], [0], [0], [1], [0, 0, 1, 1], [], []>} : vector<8x8xbf16>, vector<8x512xbf16>, vector<8x512xf32> -> vector<8x512xf32>
    %75 = arith.addf %32, %74 : vector<8x512xf32>
    %76 = vector.extract_strided_slice %6 {offsets = [0, 2], sizes = [8, 1], strides = [1, 1]} : vector<8x8xf32> to vector<8x1xf32>
    %77 = vector.broadcast %76 : vector<8x1xf32> to vector<8x512xf32>
    %78 = arith.addf %75, %77 : vector<8x512xf32>
    %c1_33 = arith.constant 1 : index
    %c0_34 = arith.constant 0 : index
    %c0_35 = arith.constant 0 : index
    %79 = vector.load %arg2[%c1_33, %c0_34, %c0_35] : memref<2x8x8xf32, #tpu.memory_space<vmem>>, vector<1x8x8xf32>
    %80 = vector.shape_cast %79 : vector<1x8x8xf32> to vector<8x8xf32>
    %cst_36 = arith.constant dense<0.000000e+00> : vector<512xf32>
    %81 = vector.multi_reduction <add>, %78, %cst_36 [0] : vector<8x512xf32> to vector<512xf32>
    %82 = vector.shape_cast %81 : vector<512xf32> to vector<1x512xf32>
    %cst_37 = arith.constant 2.000000e-01 : f32
    %83 = vector.broadcast %cst_37 : f32 to vector<1x512xf32>
    %84 = arith.mulf %82, %83 : vector<1x512xf32>
    %85 = vector.broadcast %84 : vector<1x512xf32> to vector<8x512xf32>
    %86 = arith.subf %78, %85 : vector<8x512xf32>
    %87 = vector.broadcast %4 : vector<8x1xf32> to vector<8x512xf32>
    %88 = arith.mulf %86, %87 : vector<8x512xf32>
    %89 = arith.mulf %88, %88 : vector<8x512xf32>
    %cst_38 = arith.constant dense<0.000000e+00> : vector<512xf32>
    %90 = vector.multi_reduction <add>, %89, %cst_38 [0] : vector<8x512xf32> to vector<512xf32>
    %91 = vector.shape_cast %90 : vector<512xf32> to vector<1x512xf32>
    %cst_39 = arith.constant 2.000000e-01 : f32
    %92 = vector.broadcast %cst_39 : f32 to vector<1x512xf32>
    %93 = arith.mulf %91, %92 : vector<1x512xf32>
    %cst_40 = arith.constant 9.99999974E-6 : f32
    %94 = vector.broadcast %cst_40 : f32 to vector<1x512xf32>
    %95 = arith.addf %93, %94 : vector<1x512xf32>
    %96 = math.rsqrt %95 : vector<1x512xf32>
    %97 = vector.broadcast %96 : vector<1x512xf32> to vector<8x512xf32>
    %98 = arith.mulf %88, %97 : vector<8x512xf32>
    %c1_41 = arith.constant 1 : index
    %c0_42 = arith.constant 0 : index
    %c0_43 = arith.constant 0 : index
    %c0_44 = arith.constant 0 : index
    %99 = vector.load %arg3[%c1_41, %c0_42, %c0_43, %c0_44] : memref<2x3x8x8xbf16, #tpu.memory_space<vmem>>, vector<1x1x8x8xbf16>
    %100 = vector.shape_cast %99 : vector<1x1x8x8xbf16> to vector<8x8xbf16>
    %101 = arith.truncf %98 : vector<8x512xf32> to vector<8x512xbf16>
    %cst_45 = arith.constant dense<0.000000e+00> : vector<8x512xf32>
    %102 = tpu.matmul %100, %101, %cst_45 {dimension_numbers = #tpu.dot_dimension_numbers<[1], [0], [0], [1], [0, 0, 1, 1], [], []>} : vector<8x8xbf16>, vector<8x512xbf16>, vector<8x512xf32> -> vector<8x512xf32>
    %103 = arith.addf %78, %102 : vector<8x512xf32>
    %104 = vector.extract_strided_slice %80 {offsets = [0, 0], sizes = [8, 1], strides = [1, 1]} : vector<8x8xf32> to vector<8x1xf32>
    %105 = vector.broadcast %104 : vector<8x1xf32> to vector<8x512xf32>
    %106 = arith.addf %103, %105 : vector<8x512xf32>
    %cst_46 = arith.constant dense<0.000000e+00> : vector<512xf32>
    %107 = vector.multi_reduction <add>, %106, %cst_46 [0] : vector<8x512xf32> to vector<512xf32>
    %108 = vector.shape_cast %107 : vector<512xf32> to vector<1x512xf32>
    %cst_47 = arith.constant 2.000000e-01 : f32
    %109 = vector.broadcast %cst_47 : f32 to vector<1x512xf32>
    %110 = arith.mulf %108, %109 : vector<1x512xf32>
    %111 = vector.broadcast %110 : vector<1x512xf32> to vector<8x512xf32>
    %112 = arith.subf %106, %111 : vector<8x512xf32>
    %113 = vector.broadcast %4 : vector<8x1xf32> to vector<8x512xf32>
    %114 = arith.mulf %112, %113 : vector<8x512xf32>
    %115 = arith.mulf %114, %114 : vector<8x512xf32>
    %cst_48 = arith.constant dense<0.000000e+00> : vector<512xf32>
    %116 = vector.multi_reduction <add>, %115, %cst_48 [0] : vector<8x512xf32> to vector<512xf32>
    %117 = vector.shape_cast %116 : vector<512xf32> to vector<1x512xf32>
    %cst_49 = arith.constant 2.000000e-01 : f32
    %118 = vector.broadcast %cst_49 : f32 to vector<1x512xf32>
    %119 = arith.mulf %117, %118 : vector<1x512xf32>
    %cst_50 = arith.constant 9.99999974E-6 : f32
    %120 = vector.broadcast %cst_50 : f32 to vector<1x512xf32>
    %121 = arith.addf %119, %120 : vector<1x512xf32>
    %122 = math.rsqrt %121 : vector<1x512xf32>
    %123 = vector.broadcast %122 : vector<1x512xf32> to vector<8x512xf32>
    %124 = arith.mulf %114, %123 : vector<8x512xf32>
    %c1_51 = arith.constant 1 : index
    %c1_52 = arith.constant 1 : index
    %c0_53 = arith.constant 0 : index
    %c0_54 = arith.constant 0 : index
    %125 = vector.load %arg3[%c1_51, %c1_52, %c0_53, %c0_54] : memref<2x3x8x8xbf16, #tpu.memory_space<vmem>>, vector<1x1x8x8xbf16>
    %126 = vector.shape_cast %125 : vector<1x1x8x8xbf16> to vector<8x8xbf16>
    %127 = arith.truncf %124 : vector<8x512xf32> to vector<8x512xbf16>
    %cst_55 = arith.constant dense<0.000000e+00> : vector<8x512xf32>
    %128 = tpu.matmul %126, %127, %cst_55 {dimension_numbers = #tpu.dot_dimension_numbers<[1], [0], [0], [1], [0, 0, 1, 1], [], []>} : vector<8x8xbf16>, vector<8x512xbf16>, vector<8x512xf32> -> vector<8x512xf32>
    %129 = vector.extract_strided_slice %80 {offsets = [0, 1], sizes = [8, 1], strides = [1, 1]} : vector<8x8xf32> to vector<8x1xf32>
    %130 = vector.broadcast %129 : vector<8x1xf32> to vector<8x512xf32>
    %131 = arith.addf %128, %130 : vector<8x512xf32>
    %cst_56 = arith.constant 5.000000e-01 : f32
    %132 = vector.broadcast %cst_56 : f32 to vector<8x512xf32>
    %133 = arith.mulf %132, %131 : vector<8x512xf32>
    %cst_57 = arith.constant 4.471500e-02 : f32
    %134 = vector.broadcast %cst_57 : f32 to vector<8x512xf32>
    %135 = arith.mulf %134, %131 : vector<8x512xf32>
    %136 = arith.mulf %135, %131 : vector<8x512xf32>
    %137 = arith.mulf %136, %131 : vector<8x512xf32>
    %138 = arith.addf %131, %137 : vector<8x512xf32>
    %cst_58 = arith.constant 0.797884583 : f32
    %139 = vector.broadcast %cst_58 : f32 to vector<8x512xf32>
    %140 = arith.mulf %139, %138 : vector<8x512xf32>
    %141 = math.tanh %140 : vector<8x512xf32>
    %cst_59 = arith.constant 1.000000e+00 : f32
    %142 = vector.broadcast %cst_59 : f32 to vector<8x512xf32>
    %143 = arith.addf %142, %141 : vector<8x512xf32>
    %144 = arith.mulf %133, %143 : vector<8x512xf32>
    %c1_60 = arith.constant 1 : index
    %c2_61 = arith.constant 2 : index
    %c0_62 = arith.constant 0 : index
    %c0_63 = arith.constant 0 : index
    %145 = vector.load %arg3[%c1_60, %c2_61, %c0_62, %c0_63] : memref<2x3x8x8xbf16, #tpu.memory_space<vmem>>, vector<1x1x8x8xbf16>
    %146 = vector.shape_cast %145 : vector<1x1x8x8xbf16> to vector<8x8xbf16>
    %147 = arith.truncf %144 : vector<8x512xf32> to vector<8x512xbf16>
    %cst_64 = arith.constant dense<0.000000e+00> : vector<8x512xf32>
    %148 = tpu.matmul %146, %147, %cst_64 {dimension_numbers = #tpu.dot_dimension_numbers<[1], [0], [0], [1], [0, 0, 1, 1], [], []>} : vector<8x8xbf16>, vector<8x512xbf16>, vector<8x512xf32> -> vector<8x512xf32>
    %149 = arith.addf %106, %148 : vector<8x512xf32>
    %150 = vector.extract_strided_slice %80 {offsets = [0, 2], sizes = [8, 1], strides = [1, 1]} : vector<8x8xf32> to vector<8x1xf32>
    %151 = vector.broadcast %150 : vector<8x1xf32> to vector<8x512xf32>
    %152 = arith.addf %149, %151 : vector<8x512xf32>
    %c0_65 = arith.constant 0 : index
    %c0_66 = arith.constant 0 : index
    %153 = vector.load %arg4[%c0_65, %c0_66] : memref<128x8xbf16, #tpu.memory_space<vmem>>, vector<128x8xbf16>
    %154 = arith.truncf %152 : vector<8x512xf32> to vector<8x512xbf16>
    %cst_67 = arith.constant dense<0.000000e+00> : vector<128x512xf32>
    %155 = tpu.matmul %153, %154, %cst_67 {dimension_numbers = #tpu.dot_dimension_numbers<[1], [0], [0], [1], [0, 0, 1, 1], [], []>} : vector<128x8xbf16>, vector<8x512xbf16>, vector<128x512xf32> -> vector<128x512xf32>
    %c0_68 = arith.constant 0 : index
    %c0_69 = arith.constant 0 : index
    %156 = vector.load %arg5[%c0_68, %c0_69] : memref<128x1xf32, #tpu.memory_space<vmem>>, vector<128x1xf32>
    %157 = vector.broadcast %156 : vector<128x1xf32> to vector<128x512xf32>
    %158 = arith.addf %155, %157 : vector<128x512xf32>
    %cst_70 = arith.constant 0.000000e+00 : f32
    %159 = vector.broadcast %cst_70 : f32 to vector<128x512xf32>
    %160 = arith.maximumf %158, %159 : vector<128x512xf32>
    %161 = vector.extract_strided_slice %160 {offsets = [0, 0], sizes = [64, 512], strides = [1, 1]} : vector<128x512xf32> to vector<64x512xf32>
    %162 = vector.extract_strided_slice %160 {offsets = [64, 0], sizes = [64, 512], strides = [1, 1]} : vector<128x512xf32> to vector<64x512xf32>
    %163 = arith.maximumf %161, %162 : vector<64x512xf32>
    %c0_71 = arith.constant 0 : index
    %c0_72 = arith.constant 0 : index
    %164 = vector.load %arg7[%c0_71, %c0_72] : memref<32x8xf32, #tpu.memory_space<vmem>>, vector<32x8xf32>
    %c0_73 = arith.constant 0 : index
    %c0_74 = arith.constant 0 : index
    %165 = vector.load %arg6[%c0_73, %c0_74] : memref<32x64xbf16, #tpu.memory_space<vmem>>, vector<32x64xbf16>
    %166 = arith.truncf %163 : vector<64x512xf32> to vector<64x512xbf16>
    %cst_75 = arith.constant dense<0.000000e+00> : vector<32x512xf32>
    %167 = tpu.matmul %165, %166, %cst_75 {dimension_numbers = #tpu.dot_dimension_numbers<[1], [0], [0], [1], [0, 0, 1, 1], [], []>} : vector<32x64xbf16>, vector<64x512xbf16>, vector<32x512xf32> -> vector<32x512xf32>
    %168 = vector.extract_strided_slice %164 {offsets = [0, 0], sizes = [32, 1], strides = [1, 1]} : vector<32x8xf32> to vector<32x1xf32>
    %169 = vector.broadcast %168 : vector<32x1xf32> to vector<32x512xf32>
    %170 = arith.addf %167, %169 : vector<32x512xf32>
    %cst_76 = arith.constant 0.000000e+00 : f32
    %171 = vector.broadcast %cst_76 : f32 to vector<32x512xf32>
    %172 = arith.maximumf %170, %171 : vector<32x512xf32>
    %173 = vector.extract_strided_slice %164 {offsets = [0, 1], sizes = [32, 1], strides = [1, 1]} : vector<32x8xf32> to vector<32x1xf32>
    %174 = vector.broadcast %173 : vector<32x1xf32> to vector<32x512xf32>
    %175 = arith.mulf %174, %172 : vector<32x512xf32>
    %cst_77 = arith.constant dense<0.000000e+00> : vector<512xf32>
    %176 = vector.multi_reduction <add>, %175, %cst_77 [0] : vector<32x512xf32> to vector<512xf32>
    %177 = vector.shape_cast %176 : vector<512xf32> to vector<1x512xf32>
    %178 = vector.extract_strided_slice %164 {offsets = [0, 2], sizes = [1, 1], strides = [1, 1]} : vector<32x8xf32> to vector<1x1xf32>
    %179 = vector.broadcast %178 : vector<1x1xf32> to vector<1x512xf32>
    %180 = arith.addf %177, %179 : vector<1x512xf32>
    %c0_78 = arith.constant 0 : index
    %c0_79 = arith.constant 0 : index
    %181 = vector.load %arg8[%c0_78, %c0_79] : memref<1x512xf32, #tpu.memory_space<vmem>>, vector<1x512xf32>
    tpu.vector_store %arg8[%c0_78, %c0_79], %180 {strides = array<i32>} : memref<1x512xf32, #tpu.memory_space<vmem>>, vector<1x512xf32>,
    return
  }
  func.func @transform_0(%arg0: i32) -> (i32, i32) {
    %c0_i32 = arith.constant 0 : i32
    %c0_i32_0 = arith.constant 0 : i32
    return %c0_i32, %arg0 : i32, i32
  }
  func.func @transform_1(%arg0: i32) -> (i32, i32, i32) {
    %c0_i32 = arith.constant 0 : i32
    %c0_i32_0 = arith.constant 0 : i32
    %c0_i32_1 = arith.constant 0 : i32
    %c0_i32_2 = arith.constant 0 : i32
    return %c0_i32, %c0_i32_0, %c0_i32_1 : i32, i32, i32
  }
  func.func @transform_2(%arg0: i32) -> (i32, i32, i32, i32) {
    %c0_i32 = arith.constant 0 : i32
    %c0_i32_0 = arith.constant 0 : i32
    %c0_i32_1 = arith.constant 0 : i32
    %c0_i32_2 = arith.constant 0 : i32
    %c0_i32_3 = arith.constant 0 : i32
    return %c0_i32, %c0_i32_0, %c0_i32_1, %c0_i32_2 : i32, i32, i32, i32
  }
  func.func @transform_3(%arg0: i32) -> (i32, i32) {
    %c0_i32 = arith.constant 0 : i32
    %c0_i32_0 = arith.constant 0 : i32
    %c0_i32_1 = arith.constant 0 : i32
    return %c0_i32, %c0_i32_0 : i32, i32
  }
  func.func @transform_4(%arg0: i32) -> (i32, i32) {
    %c0_i32 = arith.constant 0 : i32
    %c0_i32_0 = arith.constant 0 : i32
    %c0_i32_1 = arith.constant 0 : i32
    return %c0_i32, %c0_i32_0 : i32, i32
  }
  func.func @transform_5(%arg0: i32) -> (i32, i32) {
    %c0_i32 = arith.constant 0 : i32
    %c0_i32_0 = arith.constant 0 : i32
    %c0_i32_1 = arith.constant 0 : i32
    return %c0_i32, %c0_i32_0 : i32, i32
  }
  func.func @transform_6(%arg0: i32) -> (i32, i32) {
    %c0_i32 = arith.constant 0 : i32
    %c0_i32_0 = arith.constant 0 : i32
    %c0_i32_1 = arith.constant 0 : i32
    return %c0_i32, %c0_i32_0 : i32, i32
  }
  func.func @transform_7(%arg0: i32) -> (i32, i32) {
    %c0_i32 = arith.constant 0 : i32
    %c0_i32_0 = arith.constant 0 : i32
    return %c0_i32, %arg0 : i32, i32
  }
}

</mosaic_0001>

<llo_original>
// kernel: tfcnn_forward.1
$region0: #{tfcnn_forward.1}
  #allocation0 [shape = 'u32[]', space=smem, size = 0x4, offset = 0x4, fixed_abs, tag = 'smem constant byte address 0x4 - core index']
  #allocation1 [shape = 'u32[144,128]{1,0:T(1,128)}', space=vmem, size = 0x12000, scoped, tag = 'internal scratch']
  %s0 = inlined_call_operand.vmem [shape: bf16[8,1024], index: 0, kind: input, shape index: {}]
  %s1 = inlined_call_operand.vmem [shape: f32[2,8,8], index: 1, kind: input, shape index: {}]
  %s2 = inlined_call_operand.vmem [shape: bf16[2,3,8,8], index: 2, kind: input, shape index: {}]
  %s3 = inlined_call_operand.vmem [shape: bf16[128,8], index: 3, kind: input, shape index: {}]
  %s4 = inlined_call_operand.vmem [shape: f32[128,1], index: 4, kind: input, shape index: {}]
  %s5 = inlined_call_operand.vmem [shape: bf16[32,64], index: 5, kind: input, shape index: {}]
  %s6 = inlined_call_operand.vmem [shape: f32[32,8], index: 6, kind: input, shape index: {}]
  %s7 = inlined_call_operand.vmem [shape: f32[1,1024], index: 7, kind: output, shape index: {}]
  %s8 = sld [smem:[#allocation0]]
  $region61: #{tfcnn_forward.1} parent=0
    _
  %s10 = ssub.s32 1, %s8
  %s11 = scalar_select 0, %s10, %s8
  loop: start=0, step=1, limit=4
  $region2: #{tfcnn_forward.1} parent=0 // loop_pre_header
    _
  $region3: #{tfcnn_forward.1} parent=0 // loop_header
    %s13 = sphi 0, %s17
    %p14 = scmp.ge.s32.totalorder %s13, 4
    %s23 = sphi 0, %s25
    %s26 = sphi 0, %s23
    %s27 = sphi 0, %s26
    %s43 = sphi 0, %s27
    %s47 = sphi 0, %s47
    %s49 = sphi 0, %s47
    %s50 = sphi 0, %s49
    %s64 = sphi 0, %s50
    %s68 = sphi 0, %s68
    %s70 = sphi 0, %s68
    %s71 = sphi 0, %s70
    %s85 = sphi 0, %s71
    %s89 = sphi 0, %s89
    %s91 = sphi 0, %s89
    %s92 = sphi 0, %s91
    %s106 = sphi 0, %s92
    %s110 = sphi 0, %s110
    %s112 = sphi 0, %s110
    %s113 = sphi 0, %s112
    %s127 = sphi 0, %s113
    %s131 = sphi 0, %s131
    %s133 = sphi 0, %s131
    %s134 = sphi 0, %s133
    %s148 = sphi 0, %s134
    %s152 = sphi 0, %s152
    %s154 = sphi 0, %s152
    %s155 = sphi 0, %s154
    %s169 = sphi 0, %s155
    %s175 = sphi 0, %s177
    %s178 = sphi 0, %s175
    %s179 = sphi 0, %s178
    %s195 = sphi 0, %s179
  $region4: #{tfcnn_forward.1} parent=0 // loop_header_branch
    %16 = sbr.rel (%p14) target = $region8
  $region5: #{tfcnn_forward.1} parent=0 // loop_body
    %s18 = ssub.s32 %s13, 1
    %s19 = ssub.s32 %s13, 2
    %s20 = sadd.s32 %s13, 1
    %s21 = ssub.s32 %s13, %s20
    %p22 = scmp.eq.s32.totalorder %s21, 0
    %s24 = sadd.s32 %s23, 1
    %s25 = scalar_select %p22, %s23, %s24
    %p28 = pneg %p22
    %p29 = scmp.eq.s32.totalorder %s13, 1
    %p30 = por %p28, %p29
    %p31 = scmp.ne.s32.totalorder %s23, %s26
    %p32 = scmp.eq.s32.totalorder %s13, 0
    %p33 = por %p31, %p32
    %p34 = scmp.ne.s32.totalorder %s23, %s26
    %p35 = scmp.eq.s32.totalorder %s18, 1
    %p36 = por %p34, %p35
    %p37 = scmp.ne.s32.totalorder %s26, %s27
    %p38 = scmp.eq.s32.totalorder %s18, 0
    %p39 = por %p37, %p38
    %p40 = scmp.ne.s32.totalorder %s26, %s27
    %p41 = scmp.eq.s32.totalorder %s19, 1
    %p42 = por %p40, %p41
    %p44 = scmp.ne.s32.totalorder %s27, %s43
    %p45 = scmp.eq.s32.totalorder %s19, 0
    %p46 = por %p44, %p45
    %s48 = sadd.s32 %s47, 1
    %p51 = scmp.eq.s32.totalorder %s13, 1
    %p52 = scmp.ne.s32.totalorder %s47, %s49
    %p53 = scmp.eq.s32.totalorder %s13, 0
    %p54 = por %p52, %p53
    %p55 = scmp.ne.s32.totalorder %s47, %s49
    %p56 = scmp.eq.s32.totalorder %s18, 1
    %p57 = por %p55, %p56
    %p58 = scmp.ne.s32.totalorder %s49, %s50
    %p59 = scmp.eq.s32.totalorder %s18, 0
    %p60 = por %p58, %p59
    %p61 = scmp.ne.s32.totalorder %s49, %s50
    %p62 = scmp.eq.s32.totalorder %s19, 1
    %p63 = por %p61, %p62
    %p65 = scmp.ne.s32.totalorder %s50, %s64
    %p66 = scmp.eq.s32.totalorder %s19, 0
    %p67 = por %p65, %p66
    %s69 = sadd.s32 %s68, 1
    %p72 = scmp.eq.s32.totalorder %s13, 1
    %p73 = scmp.ne.s32.totalorder %s68, %s70
    %p74 = scmp.eq.s32.totalorder %s13, 0
    %p75 = por %p73, %p74
    %p76 = scmp.ne.s32.totalorder %s68, %s70
    %p77 = scmp.eq.s32.totalorder %s18, 1
    %p78 = por %p76, %p77
    %p79 = scmp.ne.s32.totalorder %s70, %s71
    %p80 = scmp.eq.s32.totalorder %s18, 0
    %p81 = por %p79, %p80
    %p82 = scmp.ne.s32.totalorder %s70, %s71
    %p83 = scmp.eq.s32.totalorder %s19, 1
    %p84 = por %p82, %p83
    %p86 = scmp.ne.s32.totalorder %s71, %s85
    %p87 = scmp.eq.s32.totalorder %s19, 0
    %p88 = por %p86, %p87
    %s90 = sadd.s32 %s89, 1
    %p93 = scmp.eq.s32.totalorder %s13, 1
    %p94 = scmp.ne.s32.totalorder %s89, %s91
    %p95 = scmp.eq.s32.totalorder %s13, 0
    %p96 = por %p94, %p95
    %p97 = scmp.ne.s32.totalorder %s89, %s91
    %p98 = scmp.eq.s32.totalorder %s18, 1
    %p99 = por %p97, %p98
    %p100 = scmp.ne.s32.totalorder %s91, %s92
    %p101 = scmp.eq.s32.totalorder %s18, 0
    %p102 = por %p100, %p101
    %p103 = scmp.ne.s32.totalorder %s91, %s92
    %p104 = scmp.eq.s32.totalorder %s19, 1
    %p105 = por %p103, %p104
    %p107 = scmp.ne.s32.totalorder %s92, %s106
    %p108 = scmp.eq.s32.totalorder %s19, 0
    %p109 = por %p107, %p108
    %s111 = sadd.s32 %s110, 1
    %p114 = scmp.eq.s32.totalorder %s13, 1
    %p115 = scmp.ne.s32.totalorder %s110, %s112
    %p116 = scmp.eq.s32.totalorder %s13, 0
    %p117 = por %p115, %p116
    %p118 = scmp.ne.s32.totalorder %s110, %s112
    %p119 = scmp.eq.s32.totalorder %s18, 1
    %p120 = por %p118, %p119
    %p121 = scmp.ne.s32.totalorder %s112, %s113
    %p122 = scmp.eq.s32.totalorder %s18, 0
    %p123 = por %p121, %p122
    %p124 = scmp.ne.s32.totalorder %s112, %s113
    %p125 = scmp.eq.s32.totalorder %s19, 1
    %p126 = por %p124, %p125
    %p128 = scmp.ne.s32.totalorder %s113, %s127
    %p129 = scmp.eq.s32.totalorder %s19, 0
    %p130 = por %p128, %p129
    %s132 = sadd.s32 %s131, 1
    %p135 = scmp.eq.s32.totalorder %s13, 1
    %p136 = scmp.ne.s32.totalorder %s131, %s133
    %p137 = scmp.eq.s32.totalorder %s13, 0
    %p138 = por %p136, %p137
    %p139 = scmp.ne.s32.totalorder %s131, %s133
    %p140 = scmp.eq.s32.totalorder %s18, 1
    %p141 = por %p139, %p140
    %p142 = scmp.ne.s32.totalorder %s133, %s134
    %p143 = scmp.eq.s32.totalorder %s18, 0
    %p144 = por %p142, %p143
    %p145 = scmp.ne.s32.totalorder %s133, %s134
    %p146 = scmp.eq.s32.totalorder %s19, 1
    %p147 = por %p145, %p146
    %p149 = scmp.ne.s32.totalorder %s134, %s148
    %p150 = scmp.eq.s32.totalorder %s19, 0
    %p151 = por %p149, %p150
    %s153 = sadd.s32 %s152, 1
    %p156 = scmp.eq.s32.totalorder %s13, 1
    %p157 = scmp.ne.s32.totalorder %s152, %s154
    %p158 = scmp.eq.s32.totalorder %s13, 0
    %p159 = por %p157, %p158
    %p160 = scmp.ne.s32.totalorder %s152, %s154
    %p161 = scmp.eq.s32.totalorder %s18, 1
    %p162 = por %p160, %p161
    %p163 = scmp.ne.s32.totalorder %s154, %s155
    %p164 = scmp.eq.s32.totalorder %s18, 0
    %p165 = por %p163, %p164
    %p166 = scmp.ne.s32.totalorder %s154, %s155
    %p167 = scmp.eq.s32.totalorder %s19, 1
    %p168 = por %p166, %p167
    %p170 = scmp.ne.s32.totalorder %s155, %s169
    %p171 = scmp.eq.s32.totalorder %s19, 0
    %p172 = por %p170, %p171
    %s173 = ssub.s32 %s13, %s20
    %p174 = scmp.eq.s32.totalorder %s173, 0
    %s176 = sadd.s32 %s175, 1
    %s177 = scalar_select %p174, %s175, %s176
    %p180 = pneg %p174
    %p181 = scmp.eq.s32.totalorder %s13, 1
    %p182 = por %p180, %p181
    %p183 = scmp.ne.s32.totalorder %s175, %s178
    %p184 = scmp.eq.s32.totalorder %s13, 0
    %p185 = por %p183, %p184
    %p186 = scmp.ne.s32.totalorder %s175, %s178
    %p187 = scmp.eq.s32.totalorder %s18, 1
    %p188 = por %p186, %p187
    %p189 = scmp.ne.s32.totalorder %s178, %s179
    %p190 = scmp.eq.s32.totalorder %s18, 0
    %p191 = por %p189, %p190
    %p192 = scmp.ne.s32.totalorder %s178, %s179
    %p193 = scmp.eq.s32.totalorder %s19, 1
    %p194 = por %p192, %p193
    %p196 = scmp.ne.s32.totalorder %s179, %s195
    %p197 = scmp.eq.s32.totalorder %s19, 0
    %p198 = por %p196, %p197
    %p199 = scmp.le.s32.totalorder 1, %s13
    %p200 = scmp.lt.s32.totalorder %s13, 3
    %p201 = pnand %p199, %p200
    %p202 = pneg %p201
    // Predicated region
    $region9: #{tfcnn_forward.1} parent=5 // pred_check
      _
    $region10: #{tfcnn_forward.1} parent=5 // pred_check_branch
      %204 = sbr.rel (%p201) target = $region12
    $region11: #{tfcnn_forward.1} parent=5 // pred_region
      %s205 = ssub.s32 %s13, 1
      // Predicated region
      $region13: #{tfcnn_forward.1} parent=11 // pred_check
        %p206 = pneg %p60
      $region14: #{tfcnn_forward.1} parent=11 // pred_check_branch
        %208 = sbr.rel (%p206) target = $region16
      $region15: #{tfcnn_forward.1} parent=11 // pred_region
        _
      $region16: #{tfcnn_forward.1} parent=11 // pred_fallthru
        _
      // Predicated region
      $region17: #{tfcnn_forward.1} parent=11 // pred_check
        %p209 = pneg %p81
      $region18: #{tfcnn_forward.1} parent=11 // pred_check_branch
        %211 = sbr.rel (%p209) target = $region20
      $region19: #{tfcnn_forward.1} parent=11 // pred_region
        _
      $region20: #{tfcnn_forward.1} parent=11 // pred_fallthru
        _
      // Predicated region
      $region21: #{tfcnn_forward.1} parent=11 // pred_check
        %p212 = pneg %p102
      $region22: #{tfcnn_forward.1} parent=11 // pred_check_branch
        %214 = sbr.rel (%p212) target = $region24
      $region23: #{tfcnn_forward.1} parent=11 // pred_region
        _
      $region24: #{tfcnn_forward.1} parent=11 // pred_fallthru
        _
      // Predicated region
      $region25: #{tfcnn_forward.1} parent=11 // pred_check
        %p215 = pneg %p123
      $region26: #{tfcnn_forward.1} parent=11 // pred_check_branch
        %217 = sbr.rel (%p215) target = $region28
      $region27: #{tfcnn_forward.1} parent=11 // pred_region
        _
      $region28: #{tfcnn_forward.1} parent=11 // pred_fallthru
        _
      // Predicated region
      $region29: #{tfcnn_forward.1} parent=11 // pred_check
        %p218 = pneg %p144
      $region30: #{tfcnn_forward.1} parent=11 // pred_check_branch
        %220 = sbr.rel (%p218) target = $region32
      $region31: #{tfcnn_forward.1} parent=11 // pred_region
        _
      $region32: #{tfcnn_forward.1} parent=11 // pred_fallthru
        _
      // Predicated region
      $region33: #{tfcnn_forward.1} parent=11 // pred_check
        %p221 = pneg %p165
      $region34: #{tfcnn_forward.1} parent=11 // pred_check_branch
        %223 = sbr.rel (%p221) target = $region36
      $region35: #{tfcnn_forward.1} parent=11 // pred_region
        _
      $region36: #{tfcnn_forward.1} parent=11 // pred_fallthru
        _
    $region12: #{tfcnn_forward.1} parent=5 // pred_fallthru
      _
    %p224 = scmp.lt.s32.totalorder %s13, 2
    // Predicated region
    $region37: #{tfcnn_forward.1} parent=5 // pred_check
      %p225 = pneg %p224
    $region38: #{tfcnn_forward.1} parent=5 // pred_check_branch
      %227 = sbr.rel (%p225) target = $region40
    $region39: #{tfcnn_forward.1} parent=5 // pred_region
      // Predicated region
      $region41: #{tfcnn_forward.1} parent=39 // pred_check
        %p228 = pneg %p33
      $region42: #{tfcnn_forward.1} parent=39 // pred_check_branch
        %230 = sbr.rel (%p228) target = $region44
      $region43: #{tfcnn_forward.1} parent=39 // pred_region
        %s231 = smul.u32 4, %s13
        %p232 = scmp.lt.s32.totalorder %s231, 7
        %s233 = scalar_select %p232, %s231, 7
        %s234 = smul.addr %s233, 4
        %s235 = scalar_lea.vmem %s0, %s234
        %s236 = smul.u32 4, %s13
      $region44: #{tfcnn_forward.1} parent=39 // pred_fallthru
        _
    $region40: #{tfcnn_forward.1} parent=5 // pred_fallthru
      _
    %p237 = scmp.le.s32.totalorder 1, %s13
    %p238 = scmp.lt.s32.totalorder %s13, 3
    %p239 = pnand %p237, %p238
    %p240 = pneg %p239
    // Predicated region
    $region45: #{tfcnn_forward.1} parent=5 // pred_check
      _
    $region46: #{tfcnn_forward.1} parent=5 // pred_check_branch
      %242 = sbr.rel (%p239) target = $region48
    $region47: #{tfcnn_forward.1} parent=5 // pred_region
      %s243 = ssub.s32 %s13, 1
      %s244 = smul.u32 4, %s18
      %p245 = scmp.lt.s32.totalorder %s244, 7
      %s246 = scalar_select %p245, %s244, 7
      %s247 = smul.addr %s246, 4
      %s248 = scalar_lea.vmem %s0, %s247
      %p249 = pneg %p39
      %p250 = pneg %p36
      %p251 = pneg %p60
      %p252 = pneg %p57
      %p253 = pneg %p81
      %p254 = pneg %p78
      %p255 = pneg %p102
      %p256 = pneg %p99
      %p257 = pneg %p123
      %p258 = pneg %p120
      %p259 = pneg %p144
      %p260 = pneg %p141
      %p261 = pneg %p165
      %p262 = pneg %p162
      %p263 = pneg %p191
      %p264 = pneg %p188
      %s265 = smul.u32 4, %s18
      %p266 = scmp.lt.s32.totalorder %s265, 7
      %s267 = scalar_select %p266, %s265, 7
      %s268 = scalar_lea.vmem %s7, %s267
      %s269 = smul.u32 4, %s18
      %p270 = scmp.lt.s32.totalorder %s269, 7
      %s271 = scalar_select %p270, %s269, 7
      %s272 = smul.addr %s271, 4
      %s273 = scalar_lea.vmem %s0, %s272
      %s274 = smul.u32 4, %s18
      %s275 = smul.u32 4, %s18
      %p276 = scmp.lt.s32.totalorder %s275, 7
      %s277 = scalar_select %p276, %s275, 7
      %s278 = scalar_lea.vmem %s7, %s277
      %s279 = smul.u32 4, %s18
      %v281 = vld [vmem:[%s273] sm:$0xff]
      %v282 = vld [vmem:[%s273 + $0x8] sm:$0xff]
      %v283 = vunpack.c.l.bf16 %v281
      %v284 = vunpack.c.h.bf16 %v281
      %v285 = vunpack.c.l.bf16 %v282
      %v286 = vunpack.c.h.bf16 %v282
      %v287 = vld [vmem:[%s1] sm:$0xff]
      %v288 = vrot.slane %v283, 4
      %v289 = vadd.f32 %v283, %v288
      %v290 = vrot.slane %v289, 2
      %v291 = vadd.f32 %v289, %v290
      %v292 = vrot.slane %v291, 1
      %v293 = vadd.f32 %v291, %v292
      %v294 = vrot.slane %v284, 4
      %v295 = vadd.f32 %v284, %v294
      %v296 = vrot.slane %v295, 2
      %v297 = vadd.f32 %v295, %v296
      %v298 = vrot.slane %v297, 1
      %v299 = vadd.f32 %v297, %v298
      %v300 = vrot.slane %v285, 4
      %v301 = vadd.f32 %v285, %v300
      %v302 = vrot.slane %v301, 2
      %v303 = vadd.f32 %v301, %v302
      %v304 = vrot.slane %v303, 1
      %v305 = vadd.f32 %v303, %v304
      %v306 = vrot.slane %v286, 4
      %v307 = vadd.f32 %v286, %v306
      %v308 = vrot.slane %v307, 2
      %v309 = vadd.f32 %v307, %v308
      %v310 = vrot.slane %v309, 1
      %v311 = vadd.f32 %v309, %v310
      %v312 = vmul.f32 %v293, 0.2
      %v313 = vmul.f32 %v299, 0.2
      %v314 = vmul.f32 %v305, 0.2
      %v315 = vmul.f32 %v311, 0.2
      %v316 = vsub.f32 %v283, %v312
      %v317 = vsub.f32 %v284, %v313
      %v318 = vsub.f32 %v285, %v314
      %v319 = vsub.f32 %v286, %v315
      %321 = vset.pattern.permute.xlu0 3
      %322 = vperm.xlu0 %321, %v287
      %v323 = vpop.permute.xlu0 %322
      %v325 = vmul.f32 %v316, %v323
      %v326 = vmul.f32 %v317, %v323
      %v327 = vmul.f32 %v318, %v323
      %v328 = vmul.f32 %v319, %v323
      %v329 = vmul.f32 %v325, %v325
      %v330 = vmul.f32 %v326, %v326
      %v331 = vmul.f32 %v327, %v327
      %v332 = vmul.f32 %v328, %v328
      %v333 = vrot.slane %v329, 4
      %v334 = vadd.f32 %v329, %v333
      %v335 = vrot.slane %v334, 2
      %v336 = vadd.f32 %v334, %v335
      %v337 = vrot.slane %v336, 1
      %v338 = vadd.f32 %v336, %v337
      %v339 = vrot.slane %v330, 4
      %v340 = vadd.f32 %v330, %v339
      %v341 = vrot.slane %v340, 2
      %v342 = vadd.f32 %v340, %v341
      %v343 = vrot.slane %v342, 1
      %v344 = vadd.f32 %v342, %v343
      %v345 = vrot.slane %v331, 4
      %v346 = vadd.f32 %v331, %v345
      %v347 = vrot.slane %v346, 2
      %v348 = vadd.f32 %v346, %v347
      %v349 = vrot.slane %v348, 1
      %v350 = vadd.f32 %v348, %v349
      %v351 = vrot.slane %v332, 4
      %v352 = vadd.f32 %v332, %v351
      %v353 = vrot.slane %v352, 2
      %v354 = vadd.f32 %v352, %v353
      %v355 = vrot.slane %v354, 1
      %v356 = vadd.f32 %v354, %v355
      %v357 = vmul.f32 %v338, 0.2
      %v358 = vmul.f32 %v344, 0.2
      %v359 = vmul.f32 %v350, 0.2
      %v360 = vmul.f32 %v356, 0.2
      %v361 = vadd.f32 %v357, 1e-05
      %v362 = vadd.f32 %v358, 1e-05
      %v363 = vadd.f32 %v359, 1e-05
      %v364 = vadd.f32 %v360, 1e-05
      %v365 = vrsqrt.pop %v361
      %v366 = vrsqrt.pop %v362
      %v367 = vrsqrt.pop %v363
      %v368 = vrsqrt.pop %v364
      %v369 = vmul.f32 %v325, %v365
      %v370 = vmul.f32 %v326, %v366
      %v371 = vmul.f32 %v327, %v367
      %v372 = vmul.f32 %v328, %v368
      %v373 = vld [vmem:[%s2] sm:$0xf]
      %v374 = vpack.c.bf16 %v369, %v369
      %v375 = vpack.c.bf16 %v370, %v370
      %v376 = vpack.c.bf16 %v371, %v371
      %v377 = vpack.c.bf16 %v372, %v372
      %vm378 = vcmask 64512
      %v380 = vsel %vm378, %v373, 0
      %vm382 = vcmask 1043456
      %v384 = vsel %vm382, %v374, 0
      %v387 = vsel %vm382, %v375, 0
      %v390 = vsel %vm382, %v376, 0
      %v393 = vsel %vm382, %v377, 0
      %395 = vmatprep.subr.bf16.mxu0 %v387
      %396 = vmatpush1.bf16.msra.mxu0 %v384
      %397 = vmatprep.subr.bf16.mxu0 0
      %398 = vmatpush1.bf16.msra.mxu0 0
      %399 = vmatprep.subr.bf16.mxu0 0
      %400 = vmatpush1.bf16.msra.mxu0 0
      %401 = vmatprep.subr.bf16.mxu0 0
      %402 = vmatpush1.bf16.msra.mxu0 0
      %403 = vmatprep.subr.bf16.mxu0 0
      %404 = vmatpush1.bf16.msra.mxu0 0
      %405 = vmatprep.subr.bf16.mxu0 0
      %406 = vmatpush1.bf16.msra.mxu0 0
      %407 = vmatprep.subr.bf16.mxu0 0
      %408 = vmatpush1.bf16.msra.mxu0 0
      %409 = vmatprep.subr.bf16.mxu0 0
      %410 = vmatpush1.bf16.msra.mxu0 0
      %411 = vmatprep.subr.bf16.mxu0 0
      %412 = vmatpush1.bf16.msra.mxu0 0
      %413 = vmatprep.subr.bf16.mxu0 0
      %414 = vmatpush1.bf16.msra.mxu0 0
      %415 = vmatprep.subr.bf16.mxu0 0
      %416 = vmatpush1.bf16.msra.mxu0 0
      %417 = vmatprep.subr.bf16.mxu0 0
      %418 = vmatpush1.bf16.msra.mxu0 0
      %419 = vmatprep.subr.bf16.mxu0 0
      %420 = vmatpush1.bf16.msra.mxu0 0
      %421 = vmatprep.subr.bf16.mxu0 0
      %422 = vmatpush1.bf16.msra.mxu0 0
      %423 = vmatprep.subr.bf16.mxu0 0
      %424 = vmatpush1.bf16.msra.mxu0 0
      %425 = vmatprep.subr.bf16.mxu0 0
      %426 = vmatpush1.bf16.msra.mxu0 0
      %427 = vmatprep.mubr.bf16.mxu0 0
      %428 = vmatmul.mubr.bf16.gmra.mrb[0].mxu0 %v380
      %v429 = vpop.f32.mrb[0].mxu0
      %v430 = vadd.f32 0.0, %v429
      %v431 = vpop.f32.mrb[0].mxu0
      %v432 = vadd.f32 0.0, %v431
      %v433 = vpop.f32.mrb[0].mxu0
      %v434 = vpop.f32.mrb[0].mxu0
      %435 = vdwg.mxu0
      %436 = vmatprep.subr.bf16.mxu0 %v393
      %437 = vmatpush1.bf16.msra.mxu0 %v390
      %438 = vmatprep.subr.bf16.mxu0 0
      %439 = vmatpush1.bf16.msra.mxu0 0
      %440 = vmatprep.subr.bf16.mxu0 0
      %441 = vmatpush1.bf16.msra.mxu0 0
      %442 = vmatprep.subr.bf16.mxu0 0
      %443 = vmatpush1.bf16.msra.mxu0 0
      %444 = vmatprep.subr.bf16.mxu0 0
      %445 = vmatpush1.bf16.msra.mxu0 0
      %446 = vmatprep.subr.bf16.mxu0 0
      %447 = vmatpush1.bf16.msra.mxu0 0
      %448 = vmatprep.subr.bf16.mxu0 0
      %449 = vmatpush1.bf16.msra.mxu0 0
      %450 = vmatprep.subr.bf16.mxu0 0
      %451 = vmatpush1.bf16.msra.mxu0 0
      %452 = vmatprep.subr.bf16.mxu0 0
      %453 = vmatpush1.bf16.msra.mxu0 0
      %454 = vmatprep.subr.bf16.mxu0 0
      %455 = vmatpush1.bf16.msra.mxu0 0
      %456 = vmatprep.subr.bf16.mxu0 0
      %457 = vmatpush1.bf16.msra.mxu0 0
      %458 = vmatprep.subr.bf16.mxu0 0
      %459 = vmatpush1.bf16.msra.mxu0 0
      %460 = vmatprep.subr.bf16.mxu0 0
      %461 = vmatpush1.bf16.msra.mxu0 0
      %462 = vmatprep.subr.bf16.mxu0 0
      %463 = vmatpush1.bf16.msra.mxu0 0
      %464 = vmatprep.subr.bf16.mxu0 0
      %465 = vmatpush1.bf16.msra.mxu0 0
      %466 = vmatprep.subr.bf16.mxu0 0
      %467 = vmatpush1.bf16.msra.mxu0 0
      %468 = vmatprep.mubr.bf16.mxu0 0
      %469 = vmatmul.mubr.bf16.gmra.mrb[0].mxu0 %v380
      %v470 = vpop.f32.mrb[0].mxu0
      %v471 = vadd.f32 0.0, %v470
      %v472 = vpop.f32.mrb[0].mxu0
      %v473 = vadd.f32 0.0, %v472
      %v474 = vpop.f32.mrb[0].mxu0
      %v475 = vpop.f32.mrb[0].mxu0
      %476 = vdwg.mxu0
      %v477 = vadd.f32 %v283, %v430
      %v478 = vadd.f32 %v284, %v432
      %v479 = vadd.f32 %v285, %v471
      %v480 = vadd.f32 %v286, %v473
      %481 = vset.pattern.permute.xlu0 0
      %482 = vperm.xlu0 %481, %v287
      %v483 = vpop.permute.xlu0 %482
      %v485 = vadd.f32 %v477, %v483
      %v486 = vadd.f32 %v478, %v483
      %v487 = vadd.f32 %v479, %v483
      %v488 = vadd.f32 %v480, %v483
      %v489 = vrot.slane %v485, 4
      %v490 = vadd.f32 %v485, %v489
      %v491 = vrot.slane %v490, 2
      %v492 = vadd.f32 %v490, %v491
      %v493 = vrot.slane %v492, 1
      %v494 = vadd.f32 %v492, %v493
      %v495 = vrot.slane %v486, 4
      %v496 = vadd.f32 %v486, %v495
      %v497 = vrot.slane %v496, 2
      %v498 = vadd.f32 %v496, %v497
      %v499 = vrot.slane %v498, 1
      %v500 = vadd.f32 %v498, %v499
      %v501 = vrot.slane %v487, 4
      %v502 = vadd.f32 %v487, %v501
      %v503 = vrot.slane %v502, 2
      %v504 = vadd.f32 %v502, %v503
      %v505 = vrot.slane %v504, 1
      %v506 = vadd.f32 %v504, %v505
      %v507 = vrot.slane %v488, 4
      %v508 = vadd.f32 %v488, %v507
      %v509 = vrot.slane %v508, 2
      %v510 = vadd.f32 %v508, %v509
      %v511 = vrot.slane %v510, 1
      %v512 = vadd.f32 %v510, %v511
      %v513 = vmul.f32 %v494, 0.2
      %v514 = vmul.f32 %v500, 0.2
      %v515 = vmul.f32 %v506, 0.2
      %v516 = vmul.f32 %v512, 0.2
      %v517 = vsub.f32 %v485, %v513
      %v518 = vsub.f32 %v486, %v514
      %v519 = vsub.f32 %v487, %v515
      %v520 = vsub.f32 %v488, %v516
      %v521 = vmul.f32 %v517, %v323
      %v522 = vmul.f32 %v518, %v323
      %v523 = vmul.f32 %v519, %v323
      %v524 = vmul.f32 %v520, %v323
      %v525 = vmul.f32 %v521, %v521
      %v526 = vmul.f32 %v522, %v522
      %v527 = vmul.f32 %v523, %v523
      %v528 = vmul.f32 %v524, %v524
      %v529 = vrot.slane %v525, 4
      %v530 = vadd.f32 %v525, %v529
      %v531 = vrot.slane %v530, 2
      %v532 = vadd.f32 %v530, %v531
      %v533 = vrot.slane %v532, 1
      %v534 = vadd.f32 %v532, %v533
      %v535 = vrot.slane %v526, 4
      %v536 = vadd.f32 %v526, %v535
      %v537 = vrot.slane %v536, 2
      %v538 = vadd.f32 %v536, %v537
      %v539 = vrot.slane %v538, 1
      %v540 = vadd.f32 %v538, %v539
      %v541 = vrot.slane %v527, 4
      %v542 = vadd.f32 %v527, %v541
      %v543 = vrot.slane %v542, 2
      %v544 = vadd.f32 %v542, %v543
      %v545 = vrot.slane %v544, 1
      %v546 = vadd.f32 %v544, %v545
      %v547 = vrot.slane %v528, 4
      %v548 = vadd.f32 %v528, %v547
      %v549 = vrot.slane %v548, 2
      %v550 = vadd.f32 %v548, %v549
      %v551 = vrot.slane %v550, 1
      %v552 = vadd.f32 %v550, %v551
      %v553 = vmul.f32 %v534, 0.2
      %v554 = vmul.f32 %v540, 0.2
      %v555 = vmul.f32 %v546, 0.2
      %v556 = vmul.f32 %v552, 0.2
      %v557 = vadd.f32 %v553, 1e-05
      %v558 = vadd.f32 %v554, 1e-05
      %v559 = vadd.f32 %v555, 1e-05
      %v560 = vadd.f32 %v556, 1e-05
      %v561 = vrsqrt.pop %v557
      %v562 = vrsqrt.pop %v558
      %v563 = vrsqrt.pop %v559
      %v564 = vrsqrt.pop %v560
      %v565 = vmul.f32 %v521, %v561
      %v566 = vmul.f32 %v522, %v562
      %v567 = vmul.f32 %v523, %v563
      %v568 = vmul.f32 %v524, %v564
      %s569 = scalar_lea.vmem %s2, 4
      %v570 = vld [vmem:[%s569] sm:$0xf]
      %v571 = vpack.c.bf16 %v565, %v565
      %v572 = vpack.c.bf16 %v566, %v566
      %v573 = vpack.c.bf16 %v567, %v567
      %v574 = vpack.c.bf16 %v568, %v568
      %575 = vset.pattern.permute.xlu0 1
      %576 = vperm.xlu0 %575, %v287
      %v577 = vpop.permute.xlu0 %576
      %v580 = vsel %vm378, %v570, 0
      %v583 = vsel %vm382, %v571, 0
      %v586 = vsel %vm382, %v572, 0
      %v589 = vsel %vm382, %v573, 0
      %v592 = vsel %vm382, %v574, 0
      %594 = vmatprep.subr.bf16.mxu0 %v586
      %595 = vmatpush1.bf16.msra.mxu0 %v583
      %596 = vmatprep.subr.bf16.mxu0 0
      %597 = vmatpush1.bf16.msra.mxu0 0
      %598 = vmatprep.subr.bf16.mxu0 0
      %599 = vmatpush1.bf16.msra.mxu0 0
      %600 = vmatprep.subr.bf16.mxu0 0
      %601 = vmatpush1.bf16.msra.mxu0 0
      %602 = vmatprep.subr.bf16.mxu0 0
      %603 = vmatpush1.bf16.msra.mxu0 0
      %604 = vmatprep.subr.bf16.mxu0 0
      %605 = vmatpush1.bf16.msra.mxu0 0
      %606 = vmatprep.subr.bf16.mxu0 0
      %607 = vmatpush1.bf16.msra.mxu0 0
      %608 = vmatprep.subr.bf16.mxu0 0
      %609 = vmatpush1.bf16.msra.mxu0 0
      %610 = vmatprep.subr.bf16.mxu0 0
      %611 = vmatpush1.bf16.msra.mxu0 0
      %612 = vmatprep.subr.bf16.mxu0 0
      %613 = vmatpush1.bf16.msra.mxu0 0
      %614 = vmatprep.subr.bf16.mxu0 0
      %615 = vmatpush1.bf16.msra.mxu0 0
      %616 = vmatprep.subr.bf16.mxu0 0
      %617 = vmatpush1.bf16.msra.mxu0 0
      %618 = vmatprep.subr.bf16.mxu0 0
      %619 = vmatpush1.bf16.msra.mxu0 0
      %620 = vmatprep.subr.bf16.mxu0 0
      %621 = vmatpush1.bf16.msra.mxu0 0
      %622 = vmatprep.subr.bf16.mxu0 0
      %623 = vmatpush1.bf16.msra.mxu0 0
      %624 = vmatprep.subr.bf16.mxu0 0
      %625 = vmatpush1.bf16.msra.mxu0 0
      %626 = vmatprep.mubr.bf16.mxu0 0
      %627 = vmatmul.mubr.bf16.gmra.mrb[0].mxu0 %v580
      %v628 = vpop.f32.mrb[0].mxu0
      %v629 = vadd.f32 %v577, %v628
      %v630 = vpop.f32.mrb[0].mxu0
      %v631 = vadd.f32 %v577, %v630
      %v632 = vpop.f32.mrb[0].mxu0
      %v633 = vpop.f32.mrb[0].mxu0
      %634 = vdwg.mxu0
      %635 = vmatprep.subr.bf16.mxu0 %v592
      %636 = vmatpush1.bf16.msra.mxu0 %v589
      %637 = vmatprep.subr.bf16.mxu0 0
      %638 = vmatpush1.bf16.msra.mxu0 0
      %639 = vmatprep.subr.bf16.mxu0 0
      %640 = vmatpush1.bf16.msra.mxu0 0
      %641 = vmatprep.subr.bf16.mxu0 0
      %642 = vmatpush1.bf16.msra.mxu0 0
      %643 = vmatprep.subr.bf16.mxu0 0
      %644 = vmatpush1.bf16.msra.mxu0 0
      %645 = vmatprep.subr.bf16.mxu0 0
      %646 = vmatpush1.bf16.msra.mxu0 0
      %647 = vmatprep.subr.bf16.mxu0 0
      %648 = vmatpush1.bf16.msra.mxu0 0
      %649 = vmatprep.subr.bf16.mxu0 0
      %650 = vmatpush1.bf16.msra.mxu0 0
      %651 = vmatprep.subr.bf16.mxu0 0
      %652 = vmatpush1.bf16.msra.mxu0 0
      %653 = vmatprep.subr.bf16.mxu0 0
      %654 = vmatpush1.bf16.msra.mxu0 0
      %655 = vmatprep.subr.bf16.mxu0 0
      %656 = vmatpush1.bf16.msra.mxu0 0
      %657 = vmatprep.subr.bf16.mxu0 0
      %658 = vmatpush1.bf16.msra.mxu0 0
      %659 = vmatprep.subr.bf16.mxu0 0
      %660 = vmatpush1.bf16.msra.mxu0 0
      %661 = vmatprep.subr.bf16.mxu0 0
      %662 = vmatpush1.bf16.msra.mxu0 0
      %663 = vmatprep.subr.bf16.mxu0 0
      %664 = vmatpush1.bf16.msra.mxu0 0
      %665 = vmatprep.subr.bf16.mxu0 0
      %666 = vmatpush1.bf16.msra.mxu0 0
      %667 = vmatprep.mubr.bf16.mxu0 0
      %668 = vmatmul.mubr.bf16.gmra.mrb[0].mxu0 %v580
      %v669 = vpop.f32.mrb[0].mxu0
      %v670 = vadd.f32 %v577, %v669
      %v671 = vpop.f32.mrb[0].mxu0
      %v672 = vadd.f32 %v577, %v671
      %v673 = vpop.f32.mrb[0].mxu0
      %v674 = vpop.f32.mrb[0].mxu0
      %675 = vdwg.mxu0
      %v676 = vmul.f32 %v629, 0.5
      %v677 = vmul.f32 %v631, 0.5
      %v678 = vmul.f32 %v670, 0.5
      %v679 = vmul.f32 %v672, 0.5
      %v680 = vmul.f32 %v629, 0.044715
      %v681 = vmul.f32 %v631, 0.044715
      %v682 = vmul.f32 %v670, 0.044715
      %v683 = vmul.f32 %v672, 0.044715
      %v684 = vmul.f32 %v680, %v629
      %v685 = vmul.f32 %v681, %v631
      %v686 = vmul.f32 %v682, %v670
      %v687 = vmul.f32 %v683, %v672
      %v688 = vmul.f32 %v684, %v629
      %v689 = vmul.f32 %v685, %v631
      %v690 = vmul.f32 %v686, %v670
      %v691 = vmul.f32 %v687, %v672
      %v692 = vadd.f32 %v629, %v688
      %v693 = vadd.f32 %v631, %v689
      %v694 = vadd.f32 %v670, %v690
      %v695 = vadd.f32 %v672, %v691
      %v696 = vmul.f32 %v692, 0.7978846
      %v697 = vmul.f32 %v693, 0.7978846
      %v698 = vmul.f32 %v694, 0.7978846
      %v699 = vmul.f32 %v695, 0.7978846
      %v700 = vtanh.pop %v696
      %v701 = vtanh.pop %v697
      %v702 = vtanh.pop %v698
      %v703 = vtanh.pop %v699
      %v704 = vadd.f32 %v700, 1.0
      %v705 = vadd.f32 %v701, 1.0
      %v706 = vadd.f32 %v702, 1.0
      %v707 = vadd.f32 %v703, 1.0
      %v708 = vmul.f32 %v676, %v704
      %v709 = vmul.f32 %v677, %v705
      %v710 = vmul.f32 %v678, %v706
      %v711 = vmul.f32 %v679, %v707
      %s712 = scalar_lea.vmem %s2, 8
      %v713 = vld [vmem:[%s712] sm:$0xf]
      %v714 = vpack.c.bf16 %v708, %v708
      %v715 = vpack.c.bf16 %v709, %v709
      %v716 = vpack.c.bf16 %v710, %v710
      %v717 = vpack.c.bf16 %v711, %v711
      %v719 = vsel %vm378, %v713, 0
      %v722 = vsel %vm382, %v714, 0
      %v725 = vsel %vm382, %v715, 0
      %v728 = vsel %vm382, %v716, 0
      %v731 = vsel %vm382, %v717, 0
      %733 = vmatprep.subr.bf16.mxu0 %v725
      %734 = vmatpush1.bf16.msra.mxu0 %v722
      %735 = vmatprep.subr.bf16.mxu0 0
      %736 = vmatpush1.bf16.msra.mxu0 0
      %737 = vmatprep.subr.bf16.mxu0 0
      %738 = vmatpush1.bf16.msra.mxu0 0
      %739 = vmatprep.subr.bf16.mxu0 0
      %740 = vmatpush1.bf16.msra.mxu0 0
      %741 = vmatprep.subr.bf16.mxu0 0
      %742 = vmatpush1.bf16.msra.mxu0 0
      %743 = vmatprep.subr.bf16.mxu0 0
      %744 = vmatpush1.bf16.msra.mxu0 0
      %745 = vmatprep.subr.bf16.mxu0 0
      %746 = vmatpush1.bf16.msra.mxu0 0
      %747 = vmatprep.subr.bf16.mxu0 0
      %748 = vmatpush1.bf16.msra.mxu0 0
      %749 = vmatprep.subr.bf16.mxu0 0
      %750 = vmatpush1.bf16.msra.mxu0 0
      %751 = vmatprep.subr.bf16.mxu0 0
      %752 = vmatpush1.bf16.msra.mxu0 0
      %753 = vmatprep.subr.bf16.mxu0 0
      %754 = vmatpush1.bf16.msra.mxu0 0
      %755 = vmatprep.subr.bf16.mxu0 0
      %756 = vmatpush1.bf16.msra.mxu0 0
      %757 = vmatprep.subr.bf16.mxu0 0
      %758 = vmatpush1.bf16.msra.mxu0 0
      %759 = vmatprep.subr.bf16.mxu0 0
      %760 = vmatpush1.bf16.msra.mxu0 0
      %761 = vmatprep.subr.bf16.mxu0 0
      %762 = vmatpush1.bf16.msra.mxu0 0
      %763 = vmatprep.subr.bf16.mxu0 0
      %764 = vmatpush1.bf16.msra.mxu0 0
      %765 = vmatprep.mubr.bf16.mxu0 0
      %766 = vmatmul.mubr.bf16.gmra.mrb[0].mxu0 %v719
      %v767 = vpop.f32.mrb[0].mxu0
      %v768 = vadd.f32 0.0, %v767
      %v769 = vpop.f32.mrb[0].mxu0
      %v770 = vadd.f32 0.0, %v769
      %v771 = vpop.f32.mrb[0].mxu0
      %v772 = vpop.f32.mrb[0].mxu0
      %773 = vdwg.mxu0
      %774 = vmatprep.subr.bf16.mxu0 %v731
      %775 = vmatpush1.bf16.msra.mxu0 %v728
      %776 = vmatprep.subr.bf16.mxu0 0
      %777 = vmatpush1.bf16.msra.mxu0 0
      %778 = vmatprep.subr.bf16.mxu0 0
      %779 = vmatpush1.bf16.msra.mxu0 0
      %780 = vmatprep.subr.bf16.mxu0 0
      %781 = vmatpush1.bf16.msra.mxu0 0
      %782 = vmatprep.subr.bf16.mxu0 0
      %783 = vmatpush1.bf16.msra.mxu0 0
      %784 = vmatprep.subr.bf16.mxu0 0
      %785 = vmatpush1.bf16.msra.mxu0 0
      %786 = vmatprep.subr.bf16.mxu0 0
      %787 = vmatpush1.bf16.msra.mxu0 0
      %788 = vmatprep.subr.bf16.mxu0 0
      %789 = vmatpush1.bf16.msra.mxu0 0
      %790 = vmatprep.subr.bf16.mxu0 0
      %791 = vmatpush1.bf16.msra.mxu0 0
      %792 = vmatprep.subr.bf16.mxu0 0
      %793 = vmatpush1.bf16.msra.mxu0 0
      %794 = vmatprep.subr.bf16.mxu0 0
      %795 = vmatpush1.bf16.msra.mxu0 0
      %796 = vmatprep.subr.bf16.mxu0 0
      %797 = vmatpush1.bf16.msra.mxu0 0
      %798 = vmatprep.subr.bf16.mxu0 0
      %799 = vmatpush1.bf16.msra.mxu0 0
      %800 = vmatprep.subr.bf16.mxu0 0
      %801 = vmatpush1.bf16.msra.mxu0 0
      %802 = vmatprep.subr.bf16.mxu0 0
      %803 = vmatpush1.bf16.msra.mxu0 0
      %804 = vmatprep.subr.bf16.mxu0 0
      %805 = vmatpush1.bf16.msra.mxu0 0
      %806 = vmatprep.mubr.bf16.mxu0 0
      %807 = vmatmul.mubr.bf16.gmra.mrb[0].mxu0 %v719
      %v808 = vpop.f32.mrb[0].mxu0
      %v809 = vadd.f32 0.0, %v808
      %v810 = vpop.f32.mrb[0].mxu0
      %v811 = vadd.f32 0.0, %v810
      %v812 = vpop.f32.mrb[0].mxu0
      %v813 = vpop.f32.mrb[0].mxu0
      %814 = vdwg.mxu0
      %v815 = vadd.f32 %v485, %v768
      %v816 = vadd.f32 %v486, %v770
      %v817 = vadd.f32 %v487, %v809
      %v818 = vadd.f32 %v488, %v811
      %819 = vset.pattern.permute.xlu0 2
      %820 = vperm.xlu0 %819, %v287
      %v821 = vpop.permute.xlu0 %820
      %v823 = vadd.f32 %v815, %v821
      %v824 = vadd.f32 %v816, %v821
      %v825 = vadd.f32 %v817, %v821
      %v826 = vadd.f32 %v818, %v821
      %s827 = scalar_lea.vmem %s1, 8
      %v828 = vld [vmem:[%s827] sm:$0xff]
      %v829 = vrot.slane %v823, 4
      %v830 = vadd.f32 %v823, %v829
      %v831 = vrot.slane %v830, 2
      %v832 = vadd.f32 %v830, %v831
      %v833 = vrot.slane %v832, 1
      %v834 = vadd.f32 %v832, %v833
      %v835 = vrot.slane %v824, 4
      %v836 = vadd.f32 %v824, %v835
      %v837 = vrot.slane %v836, 2
      %v838 = vadd.f32 %v836, %v837
      %v839 = vrot.slane %v838, 1
      %v840 = vadd.f32 %v838, %v839
      %v841 = vrot.slane %v825, 4
      %v842 = vadd.f32 %v825, %v841
      %v843 = vrot.slane %v842, 2
      %v844 = vadd.f32 %v842, %v843
      %v845 = vrot.slane %v844, 1
      %v846 = vadd.f32 %v844, %v845
      %v847 = vrot.slane %v826, 4
      %v848 = vadd.f32 %v826, %v847
      %v849 = vrot.slane %v848, 2
      %v850 = vadd.f32 %v848, %v849
      %v851 = vrot.slane %v850, 1
      %v852 = vadd.f32 %v850, %v851
      %v853 = vmul.f32 %v834, 0.2
      %v854 = vmul.f32 %v840, 0.2
      %v855 = vmul.f32 %v846, 0.2
      %v856 = vmul.f32 %v852, 0.2
      %v857 = vsub.f32 %v823, %v853
      %v858 = vsub.f32 %v824, %v854
      %v859 = vsub.f32 %v825, %v855
      %v860 = vsub.f32 %v826, %v856
      %v861 = vmul.f32 %v857, %v323
      %v862 = vmul.f32 %v858, %v323
      %v863 = vmul.f32 %v859, %v323
      %v864 = vmul.f32 %v860, %v323
      %v865 = vmul.f32 %v861, %v861
      %v866 = vmul.f32 %v862, %v862
      %v867 = vmul.f32 %v863, %v863
      %v868 = vmul.f32 %v864, %v864
      %v869 = vrot.slane %v865, 4
      %v870 = vadd.f32 %v865, %v869
      %v871 = vrot.slane %v870, 2
      %v872 = vadd.f32 %v870, %v871
      %v873 = vrot.slane %v872, 1
      %v874 = vadd.f32 %v872, %v873
      %v875 = vrot.slane %v866, 4
      %v876 = vadd.f32 %v866, %v875
      %v877 = vrot.slane %v876, 2
      %v878 = vadd.f32 %v876, %v877
      %v879 = vrot.slane %v878, 1
      %v880 = vadd.f32 %v878, %v879
      %v881 = vrot.slane %v867, 4
      %v882 = vadd.f32 %v867, %v881
      %v883 = vrot.slane %v882, 2
      %v884 = vadd.f32 %v882, %v883
      %v885 = vrot.slane %v884, 1
      %v886 = vadd.f32 %v884, %v885
      %v887 = vrot.slane %v868, 4
      %v888 = vadd.f32 %v868, %v887
      %v889 = vrot.slane %v888, 2
      %v890 = vadd.f32 %v888, %v889
      %v891 = vrot.slane %v890, 1
      %v892 = vadd.f32 %v890, %v891
      %v893 = vmul.f32 %v874, 0.2
      %v894 = vmul.f32 %v880, 0.2
      %v895 = vmul.f32 %v886, 0.2
      %v896 = vmul.f32 %v892, 0.2
      %v897 = vadd.f32 %v893, 1e-05
      %v898 = vadd.f32 %v894, 1e-05
      %v899 = vadd.f32 %v895, 1e-05
      %v900 = vadd.f32 %v896, 1e-05
      %v901 = vrsqrt.pop %v897
      %v902 = vrsqrt.pop %v898
      %v903 = vrsqrt.pop %v899
      %v904 = vrsqrt.pop %v900
      %v905 = vmul.f32 %v861, %v901
      %v906 = vmul.f32 %v862, %v902
      %v907 = vmul.f32 %v863, %v903
      %v908 = vmul.f32 %v864, %v904
      %s909 = scalar_lea.vmem %s2, 12
      %v910 = vld [vmem:[%s909] sm:$0xf]
      %v911 = vpack.c.bf16 %v905, %v905
      %v912 = vpack.c.bf16 %v906, %v906
      %v913 = vpack.c.bf16 %v907, %v907
      %v914 = vpack.c.bf16 %v908, %v908
      %v916 = vsel %vm378, %v910, 0
      %v919 = vsel %vm382, %v911, 0
      %v922 = vsel %vm382, %v912, 0
      %v925 = vsel %vm382, %v913, 0
      %v928 = vsel %vm382, %v914, 0
      %930 = vmatprep.subr.bf16.mxu0 %v922
      %931 = vmatpush1.bf16.msra.mxu0 %v919
      %932 = vmatprep.subr.bf16.mxu0 0
      %933 = vmatpush1.bf16.msra.mxu0 0
      %934 = vmatprep.subr.bf16.mxu0 0
      %935 = vmatpush1.bf16.msra.mxu0 0
      %936 = vmatprep.subr.bf16.mxu0 0
      %937 = vmatpush1.bf16.msra.mxu0 0
      %938 = vmatprep.subr.bf16.mxu0 0
      %939 = vmatpush1.bf16.msra.mxu0 0
      %940 = vmatprep.subr.bf16.mxu0 0
      %941 = vmatpush1.bf16.msra.mxu0 0
      %942 = vmatprep.subr.bf16.mxu0 0
      %943 = vmatpush1.bf16.msra.mxu0 0
      %944 = vmatprep.subr.bf16.mxu0 0
      %945 = vmatpush1.bf16.msra.mxu0 0
      %946 = vmatprep.subr.bf16.mxu0 0
      %947 = vmatpush1.bf16.msra.mxu0 0
      %948 = vmatprep.subr.bf16.mxu0 0
      %949 = vmatpush1.bf16.msra.mxu0 0
      %950 = vmatprep.subr.bf16.mxu0 0
      %951 = vmatpush1.bf16.msra.mxu0 0
      %952 = vmatprep.subr.bf16.mxu0 0
      %953 = vmatpush1.bf16.msra.mxu0 0
      %954 = vmatprep.subr.bf16.mxu0 0
      %955 = vmatpush1.bf16.msra.mxu0 0
      %956 = vmatprep.subr.bf16.mxu0 0
      %957 = vmatpush1.bf16.msra.mxu0 0
      %958 = vmatprep.subr.bf16.mxu0 0
      %959 = vmatpush1.bf16.msra.mxu0 0
      %960 = vmatprep.subr.bf16.mxu0 0
      %961 = vmatpush1.bf16.msra.mxu0 0
      %962 = vmatprep.mubr.bf16.mxu0 0
      %963 = vmatmul.mubr.bf16.gmra.mrb[0].mxu0 %v916
      %v964 = vpop.f32.mrb[0].mxu0
      %v965 = vadd.f32 0.0, %v964
      %v966 = vpop.f32.mrb[0].mxu0
      %v967 = vadd.f32 0.0, %v966
      %v968 = vpop.f32.mrb[0].mxu0
      %v969 = vpop.f32.mrb[0].mxu0
      %970 = vdwg.mxu0
      %971 = vmatprep.subr.bf16.mxu0 %v928
      %972 = vmatpush1.bf16.msra.mxu0 %v925
      %973 = vmatprep.subr.bf16.mxu0 0
      %974 = vmatpush1.bf16.msra.mxu0 0
      %975 = vmatprep.subr.bf16.mxu0 0
      %976 = vmatpush1.bf16.msra.mxu0 0
      %977 = vmatprep.subr.bf16.mxu0 0
      %978 = vmatpush1.bf16.msra.mxu0 0
      %979 = vmatprep.subr.bf16.mxu0 0
      %980 = vmatpush1.bf16.msra.mxu0 0
      %981 = vmatprep.subr.bf16.mxu0 0
      %982 = vmatpush1.bf16.msra.mxu0 0
      %983 = vmatprep.subr.bf16.mxu0 0
      %984 = vmatpush1.bf16.msra.mxu0 0
      %985 = vmatprep.subr.bf16.mxu0 0
      %986 = vmatpush1.bf16.msra.mxu0 0
      %987 = vmatprep.subr.bf16.mxu0 0
      %988 = vmatpush1.bf16.msra.mxu0 0
      %989 = vmatprep.subr.bf16.mxu0 0
      %990 = vmatpush1.bf16.msra.mxu0 0
      %991 = vmatprep.subr.bf16.mxu0 0
      %992 = vmatpush1.bf16.msra.mxu0 0
      %993 = vmatprep.subr.bf16.mxu0 0
      %994 = vmatpush1.bf16.msra.mxu0 0
      %995 = vmatprep.subr.bf16.mxu0 0
      %996 = vmatpush1.bf16.msra.mxu0 0
      %997 = vmatprep.subr.bf16.mxu0 0
      %998 = vmatpush1.bf16.msra.mxu0 0
      %999 = vmatprep.subr.bf16.mxu0 0
      %1000 = vmatpush1.bf16.msra.mxu0 0
      %1001 = vmatprep.subr.bf16.mxu0 0
      %1002 = vmatpush1.bf16.msra.mxu0 0
      %1003 = vmatprep.mubr.bf16.mxu0 0
      %1004 = vmatmul.mubr.bf16.gmra.mrb[0].mxu0 %v916
      %v1005 = vpop.f32.mrb[0].mxu0
      %v1006 = vadd.f32 0.0, %v1005
      %v1007 = vpop.f32.mrb[0].mxu0
      %v1008 = vadd.f32 0.0, %v1007
      %v1009 = vpop.f32.mrb[0].mxu0
      %v1010 = vpop.f32.mrb[0].mxu0
      %1011 = vdwg.mxu0
      %v1012 = vadd.f32 %v823, %v965
      %v1013 = vadd.f32 %v824, %v967
      %v1014 = vadd.f32 %v825, %v1006
      %v1015 = vadd.f32 %v826, %v1008
      %1017 = vset.pattern.permute.xlu0 0
      %1018 = vperm.xlu0 %1017, %v828
      %v1019 = vpop.permute.xlu0 %1018
      %v1021 = vadd.f32 %v1012, %v1019
      %v1022 = vadd.f32 %v1013, %v1019
      %v1023 = vadd.f32 %v1014, %v1019
      %v1024 = vadd.f32 %v1015, %v1019
      %v1025 = vrot.slane %v1021, 4
      %v1026 = vadd.f32 %v1021, %v1025
      %v1027 = vrot.slane %v1026, 2
      %v1028 = vadd.f32 %v1026, %v1027
      %v1029 = vrot.slane %v1028, 1
      %v1030 = vadd.f32 %v1028, %v1029
      %v1031 = vrot.slane %v1022, 4
      %v1032 = vadd.f32 %v1022, %v1031
      %v1033 = vrot.slane %v1032, 2
      %v1034 = vadd.f32 %v1032, %v1033
      %v1035 = vrot.slane %v1034, 1
      %v1036 = vadd.f32 %v1034, %v1035
      %v1037 = vrot.slane %v1023, 4
      %v1038 = vadd.f32 %v1023, %v1037
      %v1039 = vrot.slane %v1038, 2
      %v1040 = vadd.f32 %v1038, %v1039
      %v1041 = vrot.slane %v1040, 1
      %v1042 = vadd.f32 %v1040, %v1041
      %v1043 = vrot.slane %v1024, 4
      %v1044 = vadd.f32 %v1024, %v1043
      %v1045 = vrot.slane %v1044, 2
      %v1046 = vadd.f32 %v1044, %v1045
      %v1047 = vrot.slane %v1046, 1
      %v1048 = vadd.f32 %v1046, %v1047
      %v1049 = vmul.f32 %v1030, 0.2
      %v1050 = vmul.f32 %v1036, 0.2
      %v1051 = vmul.f32 %v1042, 0.2
      %v1052 = vmul.f32 %v1048, 0.2
      %v1053 = vsub.f32 %v1021, %v1049
      %v1054 = vsub.f32 %v1022, %v1050
      %v1055 = vsub.f32 %v1023, %v1051
      %v1056 = vsub.f32 %v1024, %v1052
      %v1057 = vmul.f32 %v1053, %v323
      %v1058 = vmul.f32 %v1054, %v323
      %v1059 = vmul.f32 %v1055, %v323
      %v1060 = vmul.f32 %v1056, %v323
      %v1061 = vmul.f32 %v1057, %v1057
      %v1062 = vmul.f32 %v1058, %v1058
      %v1063 = vmul.f32 %v1059, %v1059
      %v1064 = vmul.f32 %v1060, %v1060
      %v1065 = vrot.slane %v1061, 4
      %v1066 = vadd.f32 %v1061, %v1065
      %v1067 = vrot.slane %v1066, 2
      %v1068 = vadd.f32 %v1066, %v1067
      %v1069 = vrot.slane %v1068, 1
      %v1070 = vadd.f32 %v1068, %v1069
      %v1071 = vrot.slane %v1062, 4
      %v1072 = vadd.f32 %v1062, %v1071
      %v1073 = vrot.slane %v1072, 2
      %v1074 = vadd.f32 %v1072, %v1073
      %v1075 = vrot.slane %v1074, 1
      %v1076 = vadd.f32 %v1074, %v1075
      %v1077 = vrot.slane %v1063, 4
      %v1078 = vadd.f32 %v1063, %v1077
      %v1079 = vrot.slane %v1078, 2
      %v1080 = vadd.f32 %v1078, %v1079
      %v1081 = vrot.slane %v1080, 1
      %v1082 = vadd.f32 %v1080, %v1081
      %v1083 = vrot.slane %v1064, 4
      %v1084 = vadd.f32 %v1064, %v1083
      %v1085 = vrot.slane %v1084, 2
      %v1086 = vadd.f32 %v1084, %v1085
      %v1087 = vrot.slane %v1086, 1
      %v1088 = vadd.f32 %v1086, %v1087
      %v1089 = vmul.f32 %v1070, 0.2
      %v1090 = vmul.f32 %v1076, 0.2
      %v1091 = vmul.f32 %v1082, 0.2
      %v1092 = vmul.f32 %v1088, 0.2
      %v1093 = vadd.f32 %v1089, 1e-05
      %v1094 = vadd.f32 %v1090, 1e-05
      %v1095 = vadd.f32 %v1091, 1e-05
      %v1096 = vadd.f32 %v1092, 1e-05
      %v1097 = vrsqrt.pop %v1093
      %v1098 = vrsqrt.pop %v1094
      %v1099 = vrsqrt.pop %v1095
      %v1100 = vrsqrt.pop %v1096
      %v1101 = vmul.f32 %v1057, %v1097
      %v1102 = vmul.f32 %v1058, %v1098
      %v1103 = vmul.f32 %v1059, %v1099
      %v1104 = vmul.f32 %v1060, %v1100
      %s1105 = scalar_lea.vmem %s2, 16
      %v1106 = vld [vmem:[%s1105] sm:$0xf]
      %v1107 = vpack.c.bf16 %v1101, %v1101
      %v1108 = vpack.c.bf16 %v1102, %v1102
      %v1109 = vpack.c.bf16 %v1103, %v1103
      %v1110 = vpack.c.bf16 %v1104, %v1104
      %1111 = vset.pattern.permute.xlu0 1
      %1112 = vperm.xlu0 %1111, %v828
      %v1113 = vpop.permute.xlu0 %1112
      %v1116 = vsel %vm378, %v1106, 0
      %v1119 = vsel %vm382, %v1107, 0
      %v1122 = vsel %vm382, %v1108, 0
      %v1125 = vsel %vm382, %v1109, 0
      %v1128 = vsel %vm382, %v1110, 0
      %1130 = vmatprep.subr.bf16.mxu0 %v1122
      %1131 = vmatpush1.bf16.msra.mxu0 %v1119
      %1132 = vmatprep.subr.bf16.mxu0 0
      %1133 = vmatpush1.bf16.msra.mxu0 0
      %1134 = vmatprep.subr.bf16.mxu0 0
      %1135 = vmatpush1.bf16.msra.mxu0 0
      %1136 = vmatprep.subr.bf16.mxu0 0
      %1137 = vmatpush1.bf16.msra.mxu0 0
      %1138 = vmatprep.subr.bf16.mxu0 0
      %1139 = vmatpush1.bf16.msra.mxu0 0
      %1140 = vmatprep.subr.bf16.mxu0 0
      %1141 = vmatpush1.bf16.msra.mxu0 0
      %1142 = vmatprep.subr.bf16.mxu0 0
      %1143 = vmatpush1.bf16.msra.mxu0 0
      %1144 = vmatprep.subr.bf16.mxu0 0
      %1145 = vmatpush1.bf16.msra.mxu0 0
      %1146 = vmatprep.subr.bf16.mxu0 0
      %1147 = vmatpush1.bf16.msra.mxu0 0
      %1148 = vmatprep.subr.bf16.mxu0 0
      %1149 = vmatpush1.bf16.msra.mxu0 0
      %1150 = vmatprep.subr.bf16.mxu0 0
      %1151 = vmatpush1.bf16.msra.mxu0 0
      %1152 = vmatprep.subr.bf16.mxu0 0
      %1153 = vmatpush1.bf16.msra.mxu0 0
      %1154 = vmatprep.subr.bf16.mxu0 0
      %1155 = vmatpush1.bf16.msra.mxu0 0
      %1156 = vmatprep.subr.bf16.mxu0 0
      %1157 = vmatpush1.bf16.msra.mxu0 0
      %1158 = vmatprep.subr.bf16.mxu0 0
      %1159 = vmatpush1.bf16.msra.mxu0 0
      %1160 = vmatprep.subr.bf16.mxu0 0
      %1161 = vmatpush1.bf16.msra.mxu0 0
      %1162 = vmatprep.mubr.bf16.mxu0 0
      %1163 = vmatmul.mubr.bf16.gmra.mrb[0].mxu0 %v1116
      %v1164 = vpop.f32.mrb[0].mxu0
      %v1165 = vadd.f32 %v1113, %v1164
      %v1166 = vpop.f32.mrb[0].mxu0
      %v1167 = vadd.f32 %v1113, %v1166
      %v1168 = vpop.f32.mrb[0].mxu0
      %v1169 = vpop.f32.mrb[0].mxu0
      %1170 = vdwg.mxu0
      %1171 = vmatprep.subr.bf16.mxu0 %v1128
      %1172 = vmatpush1.bf16.msra.mxu0 %v1125
      %1173 = vmatprep.subr.bf16.mxu0 0
      %1174 = vmatpush1.bf16.msra.mxu0 0
      %1175 = vmatprep.subr.bf16.mxu0 0
      %1176 = vmatpush1.bf16.msra.mxu0 0
      %1177 = vmatprep.subr.bf16.mxu0 0
      %1178 = vmatpush1.bf16.msra.mxu0 0
      %1179 = vmatprep.subr.bf16.mxu0 0
      %1180 = vmatpush1.bf16.msra.mxu0 0
      %1181 = vmatprep.subr.bf16.mxu0 0
      %1182 = vmatpush1.bf16.msra.mxu0 0
      %1183 = vmatprep.subr.bf16.mxu0 0
      %1184 = vmatpush1.bf16.msra.mxu0 0
      %1185 = vmatprep.subr.bf16.mxu0 0
      %1186 = vmatpush1.bf16.msra.mxu0 0
      %1187 = vmatprep.subr.bf16.mxu0 0
      %1188 = vmatpush1.bf16.msra.mxu0 0
      %1189 = vmatprep.subr.bf16.mxu0 0
      %1190 = vmatpush1.bf16.msra.mxu0 0
      %1191 = vmatprep.subr.bf16.mxu0 0
      %1192 = vmatpush1.bf16.msra.mxu0 0
      %1193 = vmatprep.subr.bf16.mxu0 0
      %1194 = vmatpush1.bf16.msra.mxu0 0
      %1195 = vmatprep.subr.bf16.mxu0 0
      %1196 = vmatpush1.bf16.msra.mxu0 0
      %1197 = vmatprep.subr.bf16.mxu0 0
      %1198 = vmatpush1.bf16.msra.mxu0 0
      %1199 = vmatprep.subr.bf16.mxu0 0
      %1200 = vmatpush1.bf16.msra.mxu0 0
      %1201 = vmatprep.subr.bf16.mxu0 0
      %1202 = vmatpush1.bf16.msra.mxu0 0
      %1203 = vmatprep.mubr.bf16.mxu0 0
      %1204 = vmatmul.mubr.bf16.gmra.mrb[0].mxu0 %v1116
      %v1205 = vpop.f32.mrb[0].mxu0
      %v1206 = vadd.f32 %v1113, %v1205
      %v1207 = vpop.f32.mrb[0].mxu0
      %v1208 = vadd.f32 %v1113, %v1207
      %v1209 = vpop.f32.mrb[0].mxu0
      %v1210 = vpop.f32.mrb[0].mxu0
      %1211 = vdwg.mxu0
      %v1212 = vmul.f32 %v1165, 0.5
      %v1213 = vmul.f32 %v1167, 0.5
      %v1214 = vmul.f32 %v1206, 0.5
      %v1215 = vmul.f32 %v1208, 0.5
      %v1216 = vmul.f32 %v1165, 0.044715
      %v1217 = vmul.f32 %v1167, 0.044715
      %v1218 = vmul.f32 %v1206, 0.044715
      %v1219 = vmul.f32 %v1208, 0.044715
      %v1220 = vmul.f32 %v1216, %v1165
      %v1221 = vmul.f32 %v1217, %v1167
      %v1222 = vmul.f32 %v1218, %v1206
      %v1223 = vmul.f32 %v1219, %v1208
      %v1224 = vmul.f32 %v1220, %v1165
      %v1225 = vmul.f32 %v1221, %v1167
      %v1226 = vmul.f32 %v1222, %v1206
      %v1227 = vmul.f32 %v1223, %v1208
      %v1228 = vadd.f32 %v1165, %v1224
      %v1229 = vadd.f32 %v1167, %v1225
      %v1230 = vadd.f32 %v1206, %v1226
      %v1231 = vadd.f32 %v1208, %v1227
      %v1232 = vmul.f32 %v1228, 0.7978846
      %v1233 = vmul.f32 %v1229, 0.7978846
      %v1234 = vmul.f32 %v1230, 0.7978846
      %v1235 = vmul.f32 %v1231, 0.7978846
      %v1236 = vtanh.pop %v1232
      %v1237 = vtanh.pop %v1233
      %v1238 = vtanh.pop %v1234
      %v1239 = vtanh.pop %v1235
      %v1240 = vadd.f32 %v1236, 1.0
      %v1241 = vadd.f32 %v1237, 1.0
      %v1242 = vadd.f32 %v1238, 1.0
      %v1243 = vadd.f32 %v1239, 1.0
      %v1244 = vmul.f32 %v1212, %v1240
      %v1245 = vmul.f32 %v1213, %v1241
      %v1246 = vmul.f32 %v1214, %v1242
      %v1247 = vmul.f32 %v1215, %v1243
      %s1248 = scalar_lea.vmem %s2, 20
      %v1249 = vld [vmem:[%s1248] sm:$0xf]
      %v1250 = vpack.c.bf16 %v1244, %v1244
      %v1251 = vpack.c.bf16 %v1245, %v1245
      %v1252 = vpack.c.bf16 %v1246, %v1246
      %v1253 = vpack.c.bf16 %v1247, %v1247
      %v1255 = vsel %vm378, %v1249, 0
      %v1258 = vsel %vm382, %v1250, 0
      %v1261 = vsel %vm382, %v1251, 0
      %v1264 = vsel %vm382, %v1252, 0
      %v1267 = vsel %vm382, %v1253, 0
      %1269 = vmatprep.subr.bf16.mxu0 %v1261
      %1270 = vmatpush1.bf16.msra.mxu0 %v1258
      %1271 = vmatprep.subr.bf16.mxu0 0
      %1272 = vmatpush1.bf16.msra.mxu0 0
      %1273 = vmatprep.subr.bf16.mxu0 0
      %1274 = vmatpush1.bf16.msra.mxu0 0
      %1275 = vmatprep.subr.bf16.mxu0 0
      %1276 = vmatpush1.bf16.msra.mxu0 0
      %1277 = vmatprep.subr.bf16.mxu0 0
      %1278 = vmatpush1.bf16.msra.mxu0 0
      %1279 = vmatprep.subr.bf16.mxu0 0
      %1280 = vmatpush1.bf16.msra.mxu0 0
      %1281 = vmatprep.subr.bf16.mxu0 0
      %1282 = vmatpush1.bf16.msra.mxu0 0
      %1283 = vmatprep.subr.bf16.mxu0 0
      %1284 = vmatpush1.bf16.msra.mxu0 0
      %1285 = vmatprep.subr.bf16.mxu0 0
      %1286 = vmatpush1.bf16.msra.mxu0 0
      %1287 = vmatprep.subr.bf16.mxu0 0
      %1288 = vmatpush1.bf16.msra.mxu0 0
      %1289 = vmatprep.subr.bf16.mxu0 0
      %1290 = vmatpush1.bf16.msra.mxu0 0
      %1291 = vmatprep.subr.bf16.mxu0 0
      %1292 = vmatpush1.bf16.msra.mxu0 0
      %1293 = vmatprep.subr.bf16.mxu0 0
      %1294 = vmatpush1.bf16.msra.mxu0 0
      %1295 = vmatprep.subr.bf16.mxu0 0
      %1296 = vmatpush1.bf16.msra.mxu0 0
      %1297 = vmatprep.subr.bf16.mxu0 0
      %1298 = vmatpush1.bf16.msra.mxu0 0
      %1299 = vmatprep.subr.bf16.mxu0 0
      %1300 = vmatpush1.bf16.msra.mxu0 0
      %1301 = vmatprep.mubr.bf16.mxu0 0
      %1302 = vmatmul.mubr.bf16.gmra.mrb[0].mxu0 %v1255
      %v1303 = vpop.f32.mrb[0].mxu0
      %v1304 = vadd.f32 0.0, %v1303
      %v1305 = vpop.f32.mrb[0].mxu0
      %v1306 = vadd.f32 0.0, %v1305
      %v1307 = vpop.f32.mrb[0].mxu0
      %v1308 = vpop.f32.mrb[0].mxu0
      %1309 = vdwg.mxu0
      %1310 = vmatprep.subr.bf16.mxu0 %v1267
      %1311 = vmatpush1.bf16.msra.mxu0 %v1264
      %1312 = vmatprep.subr.bf16.mxu0 0
      %1313 = vmatpush1.bf16.msra.mxu0 0
      %1314 = vmatprep.subr.bf16.mxu0 0
      %1315 = vmatpush1.bf16.msra.mxu0 0
      %1316 = vmatprep.subr.bf16.mxu0 0
      %1317 = vmatpush1.bf16.msra.mxu0 0
      %1318 = vmatprep.subr.bf16.mxu0 0
      %1319 = vmatpush1.bf16.msra.mxu0 0
      %1320 = vmatprep.subr.bf16.mxu0 0
      %1321 = vmatpush1.bf16.msra.mxu0 0
      %1322 = vmatprep.subr.bf16.mxu0 0
      %1323 = vmatpush1.bf16.msra.mxu0 0
      %1324 = vmatprep.subr.bf16.mxu0 0
      %1325 = vmatpush1.bf16.msra.mxu0 0
      %1326 = vmatprep.subr.bf16.mxu0 0
      %1327 = vmatpush1.bf16.msra.mxu0 0
      %1328 = vmatprep.subr.bf16.mxu0 0
      %1329 = vmatpush1.bf16.msra.mxu0 0
      %1330 = vmatprep.subr.bf16.mxu0 0
      %1331 = vmatpush1.bf16.msra.mxu0 0
      %1332 = vmatprep.subr.bf16.mxu0 0
      %1333 = vmatpush1.bf16.msra.mxu0 0
      %1334 = vmatprep.subr.bf16.mxu0 0
      %1335 = vmatpush1.bf16.msra.mxu0 0
      %1336 = vmatprep.subr.bf16.mxu0 0
      %1337 = vmatpush1.bf16.msra.mxu0 0
      %1338 = vmatprep.subr.bf16.mxu0 0
      %1339 = vmatpush1.bf16.msra.mxu0 0
      %1340 = vmatprep.subr.bf16.mxu0 0
      %1341 = vmatpush1.bf16.msra.mxu0 0
      %1342 = vmatprep.mubr.bf16.mxu0 0
      %1343 = vmatmul.mubr.bf16.gmra.mrb[0].mxu0 %v1255
      %v1344 = vpop.f32.mrb[0].mxu0
      %v1345 = vadd.f32 0.0, %v1344
      %v1346 = vpop.f32.mrb[0].mxu0
      %v1347 = vadd.f32 0.0, %v1346
      %v1348 = vpop.f32.mrb[0].mxu0
      %v1349 = vpop.f32.mrb[0].mxu0
      %1350 = vdwg.mxu0
      %v1351 = vadd.f32 %v1021, %v1304
      %v1352 = vadd.f32 %v1022, %v1306
      %v1353 = vadd.f32 %v1023, %v1345
      %v1354 = vadd.f32 %v1024, %v1347
      %1355 = vset.pattern.permute.xlu0 2
      %1356 = vperm.xlu0 %1355, %v828
      %v1357 = vpop.permute.xlu0 %1356
      %v1359 = vadd.f32 %v1351, %v1357
      %v1360 = vadd.f32 %v1352, %v1357
      %v1361 = vadd.f32 %v1353, %v1357
      %v1362 = vadd.f32 %v1354, %v1357
      %v1363 = vld [vmem:[%s3] sm:$0xf]
      %v1364 = vld [vmem:[%s3 + $0x4] sm:$0xf]
      %v1365 = vld [vmem:[%s3 + $0x8] sm:$0xf]
      %v1366 = vld [vmem:[%s3 + $0xc] sm:$0xf]
      %v1367 = vld [vmem:[%s3 + $0x10] sm:$0xf]
      %v1368 = vld [vmem:[%s3 + $0x14] sm:$0xf]
      %v1369 = vld [vmem:[%s3 + $0x18] sm:$0xf]
      %v1370 = vld [vmem:[%s3 + $0x1c] sm:$0xf]
      %v1371 = vld [vmem:[%s3 + $0x20] sm:$0xf]
      %v1372 = vld [vmem:[%s3 + $0x24] sm:$0xf]
      %v1373 = vld [vmem:[%s3 + $0x28] sm:$0xf]
      %v1374 = vld [vmem:[%s3 + $0x2c] sm:$0xf]
      %v1375 = vld [vmem:[%s3 + $0x30] sm:$0xf]
      %v1376 = vld [vmem:[%s3 + $0x34] sm:$0xf]
      %v1377 = vld [vmem:[%s3 + $0x38] sm:$0xf]
      %v1378 = vld [vmem:[%s3 + $0x3c] sm:$0xf]
      %v1379 = vpack.c.bf16 %v1359, %v1359
      %v1380 = vpack.c.bf16 %v1360, %v1360
      %v1381 = vpack.c.bf16 %v1361, %v1361
      %v1382 = vpack.c.bf16 %v1362, %v1362
      %v1383 = vld [vmem:[%s4] sm:$0xff]
      %v1384 = vld [vmem:[%s4 + $0x8] sm:$0xff]
      %v1385 = vld [vmem:[%s4 + $0x10] sm:$0xff]
      %v1386 = vld [vmem:[%s4 + $0x18] sm:$0xff]
      %v1387 = vld [vmem:[%s4 + $0x20] sm:$0xff]
      %v1388 = vld [vmem:[%s4 + $0x28] sm:$0xff]
      %v1389 = vld [vmem:[%s4 + $0x30] sm:$0xff]
      %v1390 = vld [vmem:[%s4 + $0x38] sm:$0xff]
      %v1391 = vld [vmem:[%s4 + $0x40] sm:$0xff]
      %v1392 = vld [vmem:[%s4 + $0x48] sm:$0xff]
      %v1393 = vld [vmem:[%s4 + $0x50] sm:$0xff]
      %v1394 = vld [vmem:[%s4 + $0x58] sm:$0xff]
      %v1395 = vld [vmem:[%s4 + $0x60] sm:$0xff]
      %v1396 = vld [vmem:[%s4 + $0x68] sm:$0xff]
      %v1397 = vld [vmem:[%s4 + $0x70] sm:$0xff]
      %v1398 = vld [vmem:[%s4 + $0x78] sm:$0xff]
      %1400 = vset.pattern.permute.xlu0 0
      %1401 = vperm.xlu0 %1400, %v1383
      %v1402 = vpop.permute.xlu0 %1401
      %1405 = vset.pattern.permute.xlu0 0
      %1406 = vperm.xlu0 %1405, %v1384
      %v1407 = vpop.permute.xlu0 %1406
      %1410 = vset.pattern.permute.xlu0 0
      %1411 = vperm.xlu0 %1410, %v1385
      %v1412 = vpop.permute.xlu0 %1411
      %1415 = vset.pattern.permute.xlu0 0
      %1416 = vperm.xlu0 %1415, %v1386
      %v1417 = vpop.permute.xlu0 %1416
      %1420 = vset.pattern.permute.xlu0 0
      %1421 = vperm.xlu0 %1420, %v1387
      %v1422 = vpop.permute.xlu0 %1421
      %1425 = vset.pattern.permute.xlu0 0
      %1426 = vperm.xlu0 %1425, %v1388
      %v1427 = vpop.permute.xlu0 %1426
      %1430 = vset.pattern.permute.xlu0 0
      %1431 = vperm.xlu0 %1430, %v1389
      %v1432 = vpop.permute.xlu0 %1431
      %1435 = vset.pattern.permute.xlu0 0
      %1436 = vperm.xlu0 %1435, %v1390
      %v1437 = vpop.permute.xlu0 %1436
      %1440 = vset.pattern.permute.xlu0 0
      %1441 = vperm.xlu0 %1440, %v1391
      %v1442 = vpop.permute.xlu0 %1441
      %1445 = vset.pattern.permute.xlu0 0
      %1446 = vperm.xlu0 %1445, %v1392
      %v1447 = vpop.permute.xlu0 %1446
      %1450 = vset.pattern.permute.xlu0 0
      %1451 = vperm.xlu0 %1450, %v1393
      %v1452 = vpop.permute.xlu0 %1451
      %1455 = vset.pattern.permute.xlu0 0
      %1456 = vperm.xlu0 %1455, %v1394
      %v1457 = vpop.permute.xlu0 %1456
      %1460 = vset.pattern.permute.xlu0 0
      %1461 = vperm.xlu0 %1460, %v1395
      %v1462 = vpop.permute.xlu0 %1461
      %1465 = vset.pattern.permute.xlu0 0
      %1466 = vperm.xlu0 %1465, %v1396
      %v1467 = vpop.permute.xlu0 %1466
      %1470 = vset.pattern.permute.xlu0 0
      %1471 = vperm.xlu0 %1470, %v1397
      %v1472 = vpop.permute.xlu0 %1471
      %1475 = vset.pattern.permute.xlu0 0
      %1476 = vperm.xlu0 %1475, %v1398
      %v1477 = vpop.permute.xlu0 %1476
      %v1495 = vunpack.c.l.b16 %v1363
      %v1496 = vunpack.c.l.b16 %v1364
      %v1497 = vunpack.c.l.b16 %v1365
      %v1498 = vunpack.c.l.b16 %v1366
      %v1499 = vunpack.c.l.b16 %v1367
      %v1500 = vunpack.c.l.b16 %v1368
      %v1501 = vunpack.c.l.b16 %v1369
      %v1502 = vunpack.c.l.b16 %v1370
      %v1503 = vunpack.c.l.b16 %v1371
      %v1504 = vunpack.c.l.b16 %v1372
      %v1505 = vunpack.c.l.b16 %v1373
      %v1506 = vunpack.c.l.b16 %v1374
      %v1507 = vunpack.c.l.b16 %v1375
      %v1508 = vunpack.c.l.b16 %v1376
      %v1509 = vunpack.c.l.b16 %v1377
      %v1510 = vunpack.c.l.b16 %v1378
      %v1511 = vpack.c.b16 %v1496, %v1495
      %v1512 = vpack.c.b16 %v1498, %v1497
      %v1513 = vpack.c.b16 %v1500, %v1499
      %v1514 = vpack.c.b16 %v1502, %v1501
      %v1515 = vpack.c.b16 %v1504, %v1503
      %v1516 = vpack.c.b16 %v1506, %v1505
      %v1517 = vpack.c.b16 %v1508, %v1507
      %v1518 = vpack.c.b16 %v1510, %v1509
      %v1520 = vsel %vm378, %v1511, 0
      %v1523 = vsel %vm378, %v1512, 0
      %v1526 = vsel %vm378, %v1513, 0
      %v1529 = vsel %vm378, %v1514, 0
      %v1532 = vsel %vm378, %v1515, 0
      %v1535 = vsel %vm378, %v1516, 0
      %v1538 = vsel %vm378, %v1517, 0
      %v1541 = vsel %vm378, %v1518, 0
      %v1544 = vsel %vm382, %v1379, 0
      %v1547 = vsel %vm382, %v1380, 0
      %v1550 = vsel %vm382, %v1381, 0
      %v1553 = vsel %vm382, %v1382, 0
      %1555 = vmatprep.subr.bf16.mxu0 %v1547
      %1556 = vmatpush1.bf16.msra.mxu0 %v1544
      %1557 = vmatprep.subr.bf16.mxu0 0
      %1558 = vmatpush1.bf16.msra.mxu0 0
      %1559 = vmatprep.subr.bf16.mxu0 0
      %1560 = vmatpush1.bf16.msra.mxu0 0
      %1561 = vmatprep.subr.bf16.mxu0 0
      %1562 = vmatpush1.bf16.msra.mxu0 0
      %1563 = vmatprep.subr.bf16.mxu0 0
      %1564 = vmatpush1.bf16.msra.mxu0 0
      %1565 = vmatprep.subr.bf16.mxu0 0
      %1566 = vmatpush1.bf16.msra.mxu0 0
      %1567 = vmatprep.subr.bf16.mxu0 0
      %1568 = vmatpush1.bf16.msra.mxu0 0
      %1569 = vmatprep.subr.bf16.mxu0 0
      %1570 = vmatpush1.bf16.msra.mxu0 0
      %1571 = vmatprep.subr.bf16.mxu0 0
      %1572 = vmatpush1.bf16.msra.mxu0 0
      %1573 = vmatprep.subr.bf16.mxu0 0
      %1574 = vmatpush1.bf16.msra.mxu0 0
      %1575 = vmatprep.subr.bf16.mxu0 0
      %1576 = vmatpush1.bf16.msra.mxu0 0
      %1577 = vmatprep.subr.bf16.mxu0 0
      %1578 = vmatpush1.bf16.msra.mxu0 0
      %1579 = vmatprep.subr.bf16.mxu0 0
      %1580 = vmatpush1.bf16.msra.mxu0 0
      %1581 = vmatprep.subr.bf16.mxu0 0
      %1582 = vmatpush1.bf16.msra.mxu0 0
      %1583 = vmatprep.subr.bf16.mxu0 0
      %1584 = vmatpush1.bf16.msra.mxu0 0
      %1585 = vmatprep.subr.bf16.mxu0 0
      %1586 = vmatpush1.bf16.msra.mxu0 0
      %1587 = vmatprep.mubr.bf16.mxu0 0
      %1588 = vmatmul.mubr.bf16.gmra.mrb[0].mxu0 %v1520
      %v1589 = vpop.f32.mrb[0].mxu0
      %v1590 = vadd.f32 %v1402, %v1589
      %v1591 = vpop.f32.mrb[0].mxu0
      %v1592 = vadd.f32 %v1402, %v1591
      %v1593 = vpop.f32.mrb[0].mxu0
      %v1594 = vadd.f32 %v1407, %v1593
      %v1595 = vpop.f32.mrb[0].mxu0
      %v1596 = vadd.f32 %v1407, %v1595
      %1597 = vmatprep.mubr.bf16.mxu0 0
      %1598 = vmatmul.mubr.bf16.gmra.mrb[0].mxu0 %v1523
      %v1599 = vpop.f32.mrb[0].mxu0
      %v1600 = vadd.f32 %v1412, %v1599
      %v1601 = vpop.f32.mrb[0].mxu0
      %v1602 = vadd.f32 %v1412, %v1601
      %v1603 = vpop.f32.mrb[0].mxu0
      %v1604 = vadd.f32 %v1417, %v1603
      %v1605 = vpop.f32.mrb[0].mxu0
      %v1606 = vadd.f32 %v1417, %v1605
      %1607 = vmatprep.mubr.bf16.mxu0 0
      %1608 = vmatmul.mubr.bf16.gmra.mrb[0].mxu0 %v1526
      %v1609 = vpop.f32.mrb[0].mxu0
      %v1610 = vadd.f32 %v1422, %v1609
      %v1611 = vpop.f32.mrb[0].mxu0
      %v1612 = vadd.f32 %v1422, %v1611
      %v1613 = vpop.f32.mrb[0].mxu0
      %v1614 = vadd.f32 %v1427, %v1613
      %v1615 = vpop.f32.mrb[0].mxu0
      %v1616 = vadd.f32 %v1427, %v1615
      %1617 = vmatprep.mubr.bf16.mxu0 0
      %1618 = vmatmul.mubr.bf16.gmra.mrb[0].mxu0 %v1529
      %v1619 = vpop.f32.mrb[0].mxu0
      %v1620 = vadd.f32 %v1432, %v1619
      %v1621 = vpop.f32.mrb[0].mxu0
      %v1622 = vadd.f32 %v1432, %v1621
      %v1623 = vpop.f32.mrb[0].mxu0
      %v1624 = vadd.f32 %v1437, %v1623
      %v1625 = vpop.f32.mrb[0].mxu0
      %v1626 = vadd.f32 %v1437, %v1625
      %1627 = vmatprep.mubr.bf16.mxu0 0
      %1628 = vmatmul.mubr.bf16.gmra.mrb[0].mxu0 %v1532
      %v1629 = vpop.f32.mrb[0].mxu0
      %v1630 = vadd.f32 %v1442, %v1629
      %v1631 = vpop.f32.mrb[0].mxu0
      %v1632 = vadd.f32 %v1442, %v1631
      %v1633 = vpop.f32.mrb[0].mxu0
      %v1634 = vadd.f32 %v1447, %v1633
      %v1635 = vpop.f32.mrb[0].mxu0
      %v1636 = vadd.f32 %v1447, %v1635
      %1637 = vmatprep.mubr.bf16.mxu0 0
      %1638 = vmatmul.mubr.bf16.gmra.mrb[0].mxu0 %v1535
      %v1639 = vpop.f32.mrb[0].mxu0
      %v1640 = vadd.f32 %v1452, %v1639
      %v1641 = vpop.f32.mrb[0].mxu0
      %v1642 = vadd.f32 %v1452, %v1641
      %v1643 = vpop.f32.mrb[0].mxu0
      %v1644 = vadd.f32 %v1457, %v1643
      %v1645 = vpop.f32.mrb[0].mxu0
      %v1646 = vadd.f32 %v1457, %v1645
      %1647 = vmatprep.mubr.bf16.mxu0 0
      %1648 = vmatmul.mubr.bf16.gmra.mrb[0].mxu0 %v1538
      %v1649 = vpop.f32.mrb[0].mxu0
      %v1650 = vadd.f32 %v1462, %v1649
      %v1651 = vpop.f32.mrb[0].mxu0
      %v1652 = vadd.f32 %v1462, %v1651
      %v1653 = vpop.f32.mrb[0].mxu0
      %v1654 = vadd.f32 %v1467, %v1653
      %v1655 = vpop.f32.mrb[0].mxu0
      %v1656 = vadd.f32 %v1467, %v1655
      %1657 = vmatprep.mubr.bf16.mxu0 0
      %1658 = vmatmul.mubr.bf16.gmra.mrb[0].mxu0 %v1541
      %v1659 = vpop.f32.mrb[0].mxu0
      %v1660 = vadd.f32 %v1472, %v1659
      %v1661 = vpop.f32.mrb[0].mxu0
      %v1662 = vadd.f32 %v1472, %v1661
      %v1663 = vpop.f32.mrb[0].mxu0
      %v1664 = vadd.f32 %v1477, %v1663
      %v1665 = vpop.f32.mrb[0].mxu0
      %v1666 = vadd.f32 %v1477, %v1665
      %1667 = vdwg.mxu0
      %1668 = vmatprep.subr.bf16.mxu0 %v1553
      %1669 = vmatpush1.bf16.msra.mxu0 %v1550
      %1670 = vmatprep.subr.bf16.mxu0 0
      %1671 = vmatpush1.bf16.msra.mxu0 0
      %1672 = vmatprep.subr.bf16.mxu0 0
      %1673 = vmatpush1.bf16.msra.mxu0 0
      %1674 = vmatprep.subr.bf16.mxu0 0
      %1675 = vmatpush1.bf16.msra.mxu0 0
      %1676 = vmatprep.subr.bf16.mxu0 0
      %1677 = vmatpush1.bf16.msra.mxu0 0
      %1678 = vmatprep.subr.bf16.mxu0 0
      %1679 = vmatpush1.bf16.msra.mxu0 0
      %1680 = vmatprep.subr.bf16.mxu0 0
      %1681 = vmatpush1.bf16.msra.mxu0 0
      %1682 = vmatprep.subr.bf16.mxu0 0
      %1683 = vmatpush1.bf16.msra.mxu0 0
      %1684 = vmatprep.subr.bf16.mxu0 0
      %1685 = vmatpush1.bf16.msra.mxu0 0
      %1686 = vmatprep.subr.bf16.mxu0 0
      %1687 = vmatpush1.bf16.msra.mxu0 0
      %1688 = vmatprep.subr.bf16.mxu0 0
      %1689 = vmatpush1.bf16.msra.mxu0 0
      %1690 = vmatprep.subr.bf16.mxu0 0
      %1691 = vmatpush1.bf16.msra.mxu0 0
      %1692 = vmatprep.subr.bf16.mxu0 0
      %1693 = vmatpush1.bf16.msra.mxu0 0
      %1694 = vmatprep.subr.bf16.mxu0 0
      %1695 = vmatpush1.bf16.msra.mxu0 0
      %1696 = vmatprep.subr.bf16.mxu0 0
      %1697 = vmatpush1.bf16.msra.mxu0 0
      %1698 = vmatprep.subr.bf16.mxu0 0
      %1699 = vmatpush1.bf16.msra.mxu0 0
      %1700 = vmatprep.mubr.bf16.mxu0 0
      %1701 = vmatmul.mubr.bf16.gmra.mrb[0].mxu0 %v1520
      %v1702 = vpop.f32.mrb[0].mxu0
      %v1703 = vadd.f32 %v1402, %v1702
      %v1704 = vpop.f32.mrb[0].mxu0
      %v1705 = vadd.f32 %v1402, %v1704
      %v1706 = vpop.f32.mrb[0].mxu0
      %v1707 = vadd.f32 %v1407, %v1706
      %v1708 = vpop.f32.mrb[0].mxu0
      %v1709 = vadd.f32 %v1407, %v1708
      %1710 = vmatprep.mubr.bf16.mxu0 0
      %1711 = vmatmul.mubr.bf16.gmra.mrb[0].mxu0 %v1523
      %v1712 = vpop.f32.mrb[0].mxu0
      %v1713 = vadd.f32 %v1412, %v1712
      %v1714 = vpop.f32.mrb[0].mxu0
      %v1715 = vadd.f32 %v1412, %v1714
      %v1716 = vpop.f32.mrb[0].mxu0
      %v1717 = vadd.f32 %v1417, %v1716
      %v1718 = vpop.f32.mrb[0].mxu0
      %v1719 = vadd.f32 %v1417, %v1718
      %1720 = vmatprep.mubr.bf16.mxu0 0
      %1721 = vmatmul.mubr.bf16.gmra.mrb[0].mxu0 %v1526
      %v1722 = vpop.f32.mrb[0].mxu0
      %v1723 = vadd.f32 %v1422, %v1722
      %v1724 = vpop.f32.mrb[0].mxu0
      %v1725 = vadd.f32 %v1422, %v1724
      %v1726 = vpop.f32.mrb[0].mxu0
      %v1727 = vadd.f32 %v1427, %v1726
      %v1728 = vpop.f32.mrb[0].mxu0
      %v1729 = vadd.f32 %v1427, %v1728
      %1730 = vmatprep.mubr.bf16.mxu0 0
      %1731 = vmatmul.mubr.bf16.gmra.mrb[0].mxu0 %v1529
      %v1732 = vpop.f32.mrb[0].mxu0
      %v1733 = vadd.f32 %v1432, %v1732
      %v1734 = vpop.f32.mrb[0].mxu0
      %v1735 = vadd.f32 %v1432, %v1734
      %v1736 = vpop.f32.mrb[0].mxu0
      %v1737 = vadd.f32 %v1437, %v1736
      %v1738 = vpop.f32.mrb[0].mxu0
      %v1739 = vadd.f32 %v1437, %v1738
      %1740 = vmatprep.mubr.bf16.mxu0 0
      %1741 = vmatmul.mubr.bf16.gmra.mrb[0].mxu0 %v1532
      %v1742 = vpop.f32.mrb[0].mxu0
      %v1743 = vadd.f32 %v1442, %v1742
      %v1744 = vpop.f32.mrb[0].mxu0
      %v1745 = vadd.f32 %v1442, %v1744
      %v1746 = vpop.f32.mrb[0].mxu0
      %v1747 = vadd.f32 %v1447, %v1746
      %v1748 = vpop.f32.mrb[0].mxu0
      %v1749 = vadd.f32 %v1447, %v1748
      %1750 = vmatprep.mubr.bf16.mxu0 0
      %1751 = vmatmul.mubr.bf16.gmra.mrb[0].mxu0 %v1535
      %v1752 = vpop.f32.mrb[0].mxu0
      %v1753 = vadd.f32 %v1452, %v1752
      %v1754 = vpop.f32.mrb[0].mxu0
      %v1755 = vadd.f32 %v1452, %v1754
      %v1756 = vpop.f32.mrb[0].mxu0
      %v1757 = vadd.f32 %v1457, %v1756
      %v1758 = vpop.f32.mrb[0].mxu0
      %v1759 = vadd.f32 %v1457, %v1758
      %1760 = vmatprep.mubr.bf16.mxu0 0
      %1761 = vmatmul.mubr.bf16.gmra.mrb[0].mxu0 %v1538
      %v1762 = vpop.f32.mrb[0].mxu0
      %v1763 = vadd.f32 %v1462, %v1762
      %v1764 = vpop.f32.mrb[0].mxu0
      %v1765 = vadd.f32 %v1462, %v1764
      %v1766 = vpop.f32.mrb[0].mxu0
      %v1767 = vadd.f32 %v1467, %v1766
      %v1768 = vpop.f32.mrb[0].mxu0
      %v1769 = vadd.f32 %v1467, %v1768
      %1770 = vmatprep.mubr.bf16.mxu0 0
      %1771 = vmatmul.mubr.bf16.gmra.mrb[0].mxu0 %v1541
      %v1772 = vpop.f32.mrb[0].mxu0
      %v1773 = vadd.f32 %v1472, %v1772
      %v1774 = vpop.f32.mrb[0].mxu0
      %v1775 = vadd.f32 %v1472, %v1774
      %v1776 = vpop.f32.mrb[0].mxu0
      %v1777 = vadd.f32 %v1477, %v1776
      %v1778 = vpop.f32.mrb[0].mxu0
      %v1779 = vadd.f32 %v1477, %v1778
      %1780 = vdwg.mxu0
      %v1781 = vmax.f32 %v1590, 0.0
      %v1782 = vmax.f32 %v1592, 0.0
      %v1783 = vmax.f32 %v1703, 0.0
      %v1784 = vmax.f32 %v1705, 0.0
      %v1785 = vmax.f32 %v1594, 0.0
      %v1786 = vmax.f32 %v1596, 0.0
      %v1787 = vmax.f32 %v1707, 0.0
      %v1788 = vmax.f32 %v1709, 0.0
      %v1789 = vmax.f32 %v1600, 0.0
      %v1790 = vmax.f32 %v1602, 0.0
      %v1791 = vmax.f32 %v1713, 0.0
      %v1792 = vmax.f32 %v1715, 0.0
      %v1793 = vmax.f32 %v1604, 0.0
      %v1794 = vmax.f32 %v1606, 0.0
      %v1795 = vmax.f32 %v1717, 0.0
      %v1796 = vmax.f32 %v1719, 0.0
      %v1797 = vmax.f32 %v1610, 0.0
      %v1798 = vmax.f32 %v1612, 0.0
      %v1799 = vmax.f32 %v1723, 0.0
      %v1800 = vmax.f32 %v1725, 0.0
      %v1801 = vmax.f32 %v1614, 0.0
      %v1802 = vmax.f32 %v1616, 0.0
      %v1803 = vmax.f32 %v1727, 0.0
      %v1804 = vmax.f32 %v1729, 0.0
      %v1805 = vmax.f32 %v1620, 0.0
      %v1806 = vmax.f32 %v1622, 0.0
      %v1807 = vmax.f32 %v1733, 0.0
      %v1808 = vmax.f32 %v1735, 0.0
      %v1809 = vmax.f32 %v1624, 0.0
      %v1810 = vmax.f32 %v1626, 0.0
      %v1811 = vmax.f32 %v1737, 0.0
      %v1812 = vmax.f32 %v1739, 0.0
      %v1813 = vmax.f32 %v1630, 0.0
      %v1814 = vmax.f32 %v1632, 0.0
      %v1815 = vmax.f32 %v1743, 0.0
      %v1816 = vmax.f32 %v1745, 0.0
      %v1817 = vmax.f32 %v1634, 0.0
      %v1818 = vmax.f32 %v1636, 0.0
      %v1819 = vmax.f32 %v1747, 0.0
      %v1820 = vmax.f32 %v1749, 0.0
      %v1821 = vmax.f32 %v1640, 0.0
      %v1822 = vmax.f32 %v1642, 0.0
      %v1823 = vmax.f32 %v1753, 0.0
      %v1824 = vmax.f32 %v1755, 0.0
      %v1825 = vmax.f32 %v1644, 0.0
      %v1826 = vmax.f32 %v1646, 0.0
      %v1827 = vmax.f32 %v1757, 0.0
      %v1828 = vmax.f32 %v1759, 0.0
      %v1829 = vmax.f32 %v1650, 0.0
      %v1830 = vmax.f32 %v1652, 0.0
      %v1831 = vmax.f32 %v1763, 0.0
      %v1832 = vmax.f32 %v1765, 0.0
      %v1833 = vmax.f32 %v1654, 0.0
      %v1834 = vmax.f32 %v1656, 0.0
      %v1835 = vmax.f32 %v1767, 0.0
      %v1836 = vmax.f32 %v1769, 0.0
      %v1837 = vmax.f32 %v1660, 0.0
      %v1838 = vmax.f32 %v1662, 0.0
      %v1839 = vmax.f32 %v1773, 0.0
      %v1840 = vmax.f32 %v1775, 0.0
      %v1841 = vmax.f32 %v1664, 0.0
      %v1842 = vmax.f32 %v1666, 0.0
      %v1843 = vmax.f32 %v1777, 0.0
      %v1844 = vmax.f32 %v1779, 0.0
      %v1845 = vmax.f32 %v1781, %v1813
      %v1846 = vmax.f32 %v1782, %v1814
      %v1847 = vmax.f32 %v1783, %v1815
      %v1848 = vmax.f32 %v1784, %v1816
      %v1849 = vmax.f32 %v1785, %v1817
      %v1850 = vmax.f32 %v1786, %v1818
      %v1851 = vmax.f32 %v1787, %v1819
      %v1852 = vmax.f32 %v1788, %v1820
      %v1853 = vmax.f32 %v1789, %v1821
      %v1854 = vmax.f32 %v1790, %v1822
      %v1855 = vmax.f32 %v1791, %v1823
      %v1856 = vmax.f32 %v1792, %v1824
      %v1857 = vmax.f32 %v1793, %v1825
      %v1858 = vmax.f32 %v1794, %v1826
      %v1859 = vmax.f32 %v1795, %v1827
      %v1860 = vmax.f32 %v1796, %v1828
      %v1861 = vmax.f32 %v1797, %v1829
      %v1862 = vmax.f32 %v1798, %v1830
      %v1863 = vmax.f32 %v1799, %v1831
      %v1864 = vmax.f32 %v1800, %v1832
      %v1865 = vmax.f32 %v1801, %v1833
      %v1866 = vmax.f32 %v1802, %v1834
      %v1867 = vmax.f32 %v1803, %v1835
      %v1868 = vmax.f32 %v1804, %v1836
      %v1869 = vmax.f32 %v1805, %v1837
      %v1870 = vmax.f32 %v1806, %v1838
      %v1871 = vmax.f32 %v1807, %v1839
      %v1872 = vmax.f32 %v1808, %v1840
      %v1873 = vmax.f32 %v1809, %v1841
      %v1874 = vmax.f32 %v1810, %v1842
      %v1875 = vmax.f32 %v1811, %v1843
      %v1876 = vmax.f32 %v1812, %v1844
      %v1877 = vld [vmem:[%s6] sm:$0xff]
      %v1878 = vld [vmem:[%s6 + $0x8] sm:$0xff]
      %v1879 = vld [vmem:[%s6 + $0x10] sm:$0xff]
      %v1880 = vld [vmem:[%s6 + $0x18] sm:$0xff]
      %v1881 = vld [vmem:[%s5] sm:$0xf]
      %v1882 = vld [vmem:[%s5 + $0x4] sm:$0xf]
      %v1883 = vld [vmem:[%s5 + $0x8] sm:$0xf]
      %v1884 = vld [vmem:[%s5 + $0xc] sm:$0xf]
      %v1885 = vpack.c.bf16 %v1849, %v1845
      %v1886 = vpack.c.bf16 %v1850, %v1846
      %v1887 = vpack.c.bf16 %v1851, %v1847
      %v1888 = vpack.c.bf16 %v1852, %v1848
      %v1889 = vpack.c.bf16 %v1857, %v1853
      %v1890 = vpack.c.bf16 %v1858, %v1854
      %v1891 = vpack.c.bf16 %v1859, %v1855
      %v1892 = vpack.c.bf16 %v1860, %v1856
      %v1893 = vpack.c.bf16 %v1865, %v1861
      %v1894 = vpack.c.bf16 %v1866, %v1862
      %v1895 = vpack.c.bf16 %v1867, %v1863
      %v1896 = vpack.c.bf16 %v1868, %v1864
      %v1897 = vpack.c.bf16 %v1873, %v1869
      %v1898 = vpack.c.bf16 %v1874, %v1870
      %v1899 = vpack.c.bf16 %v1875, %v1871
      %v1900 = vpack.c.bf16 %v1876, %v1872
      %1902 = vset.pattern.permute.xlu0 0
      %1903 = vperm.xlu0 %1902, %v1877
      %v1904 = vpop.permute.xlu0 %1903
      %1907 = vset.pattern.permute.xlu0 0
      %1908 = vperm.xlu0 %1907, %v1878
      %v1909 = vpop.permute.xlu0 %1908
      %1912 = vset.pattern.permute.xlu0 0
      %1913 = vperm.xlu0 %1912, %v1879
      %v1914 = vpop.permute.xlu0 %1913
      %1917 = vset.pattern.permute.xlu0 0
      %1918 = vperm.xlu0 %1917, %v1880
      %v1919 = vpop.permute.xlu0 %1918
      %v1925 = vunpack.c.l.b16 %v1881
      %v1926 = vunpack.c.l.b16 %v1882
      %v1927 = vunpack.c.l.b16 %v1883
      %v1928 = vunpack.c.l.b16 %v1884
      %v1929 = vpack.c.b16 %v1926, %v1925
      %v1930 = vpack.c.b16 %v1928, %v1927
      %vm1931 = vcmask 523264
      %v1933 = vsel %vm1931, %v1929, 0
      %v1936 = vsel %vm1931, %v1930, 0
      %1938 = vmatprep.subr.bf16.mxu0 %v1886
      %1939 = vmatpush1.bf16.msra.mxu0 %v1885
      %1940 = vmatprep.subr.bf16.mxu0 %v1890
      %1941 = vmatpush1.bf16.msra.mxu0 %v1889
      %1942 = vmatprep.subr.bf16.mxu0 %v1894
      %1943 = vmatpush1.bf16.msra.mxu0 %v1893
      %1944 = vmatprep.subr.bf16.mxu0 %v1898
      %1945 = vmatpush1.bf16.msra.mxu0 %v1897
      %1946 = vmatprep.subr.bf16.mxu0 0
      %1947 = vmatpush1.bf16.msra.mxu0 0
      %1948 = vmatprep.subr.bf16.mxu0 0
      %1949 = vmatpush1.bf16.msra.mxu0 0
      %1950 = vmatprep.subr.bf16.mxu0 0
      %1951 = vmatpush1.bf16.msra.mxu0 0
      %1952 = vmatprep.subr.bf16.mxu0 0
      %1953 = vmatpush1.bf16.msra.mxu0 0
      %1954 = vmatprep.subr.bf16.mxu0 0
      %1955 = vmatpush1.bf16.msra.mxu0 0
      %1956 = vmatprep.subr.bf16.mxu0 0
      %1957 = vmatpush1.bf16.msra.mxu0 0
      %1958 = vmatprep.subr.bf16.mxu0 0
      %1959 = vmatpush1.bf16.msra.mxu0 0
      %1960 = vmatprep.subr.bf16.mxu0 0
      %1961 = vmatpush1.bf16.msra.mxu0 0
      %1962 = vmatprep.subr.bf16.mxu0 0
      %1963 = vmatpush1.bf16.msra.mxu0 0
      %1964 = vmatprep.subr.bf16.mxu0 0
      %1965 = vmatpush1.bf16.msra.mxu0 0
      %1966 = vmatprep.subr.bf16.mxu0 0
      %1967 = vmatpush1.bf16.msra.mxu0 0
      %1968 = vmatprep.subr.bf16.mxu0 0
      %1969 = vmatpush1.bf16.msra.mxu0 0
      %1970 = vmatprep.mubr.bf16.mxu0 0
      %1971 = vmatmul.mubr.bf16.gmra.mrb[0].mxu0 %v1933
      %v1972 = vpop.f32.mrb[0].mxu0
      %v1973 = vadd.f32 %v1904, %v1972
      %v1974 = vpop.f32.mrb[0].mxu0
      %v1975 = vadd.f32 %v1904, %v1974
      %v1976 = vpop.f32.mrb[0].mxu0
      %v1977 = vadd.f32 %v1909, %v1976
      %v1978 = vpop.f32.mrb[0].mxu0
      %v1979 = vadd.f32 %v1909, %v1978
      %1980 = vmatprep.mubr.bf16.mxu0 0
      %1981 = vmatmul.mubr.bf16.gmra.mrb[0].mxu0 %v1936
      %v1982 = vpop.f32.mrb[0].mxu0
      %v1983 = vadd.f32 %v1914, %v1982
      %v1984 = vpop.f32.mrb[0].mxu0
      %v1985 = vadd.f32 %v1914, %v1984
      %v1986 = vpop.f32.mrb[0].mxu0
      %v1987 = vadd.f32 %v1919, %v1986
      %v1988 = vpop.f32.mrb[0].mxu0
      %v1989 = vadd.f32 %v1919, %v1988
      %1990 = vdwg.mxu0
      %1991 = vmatprep.subr.bf16.mxu0 %v1888
      %1992 = vmatpush1.bf16.msra.mxu0 %v1887
      %1993 = vmatprep.subr.bf16.mxu0 %v1892
      %1994 = vmatpush1.bf16.msra.mxu0 %v1891
      %1995 = vmatprep.subr.bf16.mxu0 %v1896
      %1996 = vmatpush1.bf16.msra.mxu0 %v1895
      %1997 = vmatprep.subr.bf16.mxu0 %v1900
      %1998 = vmatpush1.bf16.msra.mxu0 %v1899
      %1999 = vmatprep.subr.bf16.mxu0 0
      %2000 = vmatpush1.bf16.msra.mxu0 0
      %2001 = vmatprep.subr.bf16.mxu0 0
      %2002 = vmatpush1.bf16.msra.mxu0 0
      %2003 = vmatprep.subr.bf16.mxu0 0
      %2004 = vmatpush1.bf16.msra.mxu0 0
      %2005 = vmatprep.subr.bf16.mxu0 0
      %2006 = vmatpush1.bf16.msra.mxu0 0
      %2007 = vmatprep.subr.bf16.mxu0 0
      %2008 = vmatpush1.bf16.msra.mxu0 0
      %2009 = vmatprep.subr.bf16.mxu0 0
      %2010 = vmatpush1.bf16.msra.mxu0 0
      %2011 = vmatprep.subr.bf16.mxu0 0
      %2012 = vmatpush1.bf16.msra.mxu0 0
      %2013 = vmatprep.subr.bf16.mxu0 0
      %2014 = vmatpush1.bf16.msra.mxu0 0
      %2015 = vmatprep.subr.bf16.mxu0 0
      %2016 = vmatpush1.bf16.msra.mxu0 0
      %2017 = vmatprep.subr.bf16.mxu0 0
      %2018 = vmatpush1.bf16.msra.mxu0 0
      %2019 = vmatprep.subr.bf16.mxu0 0
      %2020 = vmatpush1.bf16.msra.mxu0 0
      %2021 = vmatprep.subr.bf16.mxu0 0
      %2022 = vmatpush1.bf16.msra.mxu0 0
      %2023 = vmatprep.mubr.bf16.mxu0 0
      %2024 = vmatmul.mubr.bf16.gmra.mrb[0].mxu0 %v1933
      %v2025 = vpop.f32.mrb[0].mxu0
      %v2026 = vadd.f32 %v1904, %v2025
      %v2027 = vpop.f32.mrb[0].mxu0
      %v2028 = vadd.f32 %v1904, %v2027
      %v2029 = vpop.f32.mrb[0].mxu0
      %v2030 = vadd.f32 %v1909, %v2029
      %v2031 = vpop.f32.mrb[0].mxu0
      %v2032 = vadd.f32 %v1909, %v2031
      %2033 = vmatprep.mubr.bf16.mxu0 0
      %2034 = vmatmul.mubr.bf16.gmra.mrb[0].mxu0 %v1936
      %v2035 = vpop.f32.mrb[0].mxu0
      %v2036 = vadd.f32 %v1914, %v2035
      %v2037 = vpop.f32.mrb[0].mxu0
      %v2038 = vadd.f32 %v1914, %v2037
      %v2039 = vpop.f32.mrb[0].mxu0
      %v2040 = vadd.f32 %v1919, %v2039
      %v2041 = vpop.f32.mrb[0].mxu0
      %v2042 = vadd.f32 %v1919, %v2041
      %2043 = vdwg.mxu0
      %v2044 = vmax.f32 %v1973, 0.0
      %v2045 = vmax.f32 %v1975, 0.0
      %v2046 = vmax.f32 %v2026, 0.0
      %v2047 = vmax.f32 %v2028, 0.0
      %v2048 = vmax.f32 %v1977, 0.0
      %v2049 = vmax.f32 %v1979, 0.0
      %v2050 = vmax.f32 %v2030, 0.0
      %v2051 = vmax.f32 %v2032, 0.0
      %v2052 = vmax.f32 %v1983, 0.0
      %v2053 = vmax.f32 %v1985, 0.0
      %v2054 = vmax.f32 %v2036, 0.0
      %v2055 = vmax.f32 %v2038, 0.0
      %v2056 = vmax.f32 %v1987, 0.0
      %v2057 = vmax.f32 %v1989, 0.0
      %v2058 = vmax.f32 %v2040, 0.0
      %v2059 = vmax.f32 %v2042, 0.0
      %2060 = vset.pattern.permute.xlu0 1
      %2061 = vperm.xlu0 %2060, %v1877
      %v2062 = vpop.permute.xlu0 %2061
      %2064 = vset.pattern.permute.xlu0 1
      %2065 = vperm.xlu0 %2064, %v1878
      %v2066 = vpop.permute.xlu0 %2065
      %2068 = vset.pattern.permute.xlu0 1
      %2069 = vperm.xlu0 %2068, %v1879
      %v2070 = vpop.permute.xlu0 %2069
      %2072 = vset.pattern.permute.xlu0 1
      %2073 = vperm.xlu0 %2072, %v1880
      %v2074 = vpop.permute.xlu0 %2073
      %v2076 = vmul.f32 %v2062, %v2044
      %v2077 = vmul.f32 %v2062, %v2045
      %v2078 = vmul.f32 %v2062, %v2046
      %v2079 = vmul.f32 %v2062, %v2047
      %v2080 = vmul.f32 %v2066, %v2048
      %v2081 = vmul.f32 %v2066, %v2049
      %v2082 = vmul.f32 %v2066, %v2050
      %v2083 = vmul.f32 %v2066, %v2051
      %v2084 = vmul.f32 %v2070, %v2052
      %v2085 = vmul.f32 %v2070, %v2053
      %v2086 = vmul.f32 %v2070, %v2054
      %v2087 = vmul.f32 %v2070, %v2055
      %v2088 = vmul.f32 %v2074, %v2056
      %v2089 = vmul.f32 %v2074, %v2057
      %v2090 = vmul.f32 %v2074, %v2058
      %v2091 = vmul.f32 %v2074, %v2059
      %v2092 = vadd.f32 %v2076, %v2080
      %v2093 = vadd.f32 %v2092, %v2084
      %v2094 = vadd.f32 %v2093, %v2088
      %v2095 = vrot.slane %v2094, 4
      %v2096 = vadd.f32 %v2094, %v2095
      %v2097 = vrot.slane %v2096, 2
      %v2098 = vadd.f32 %v2096, %v2097
      %v2099 = vrot.slane %v2098, 1
      %v2100 = vadd.f32 %v2098, %v2099
      %v2101 = vadd.f32 %v2077, %v2081
      %v2102 = vadd.f32 %v2101, %v2085
      %v2103 = vadd.f32 %v2102, %v2089
      %v2104 = vrot.slane %v2103, 4
      %v2105 = vadd.f32 %v2103, %v2104
      %v2106 = vrot.slane %v2105, 2
      %v2107 = vadd.f32 %v2105, %v2106
      %v2108 = vrot.slane %v2107, 1
      %v2109 = vadd.f32 %v2107, %v2108
      %v2110 = vadd.f32 %v2078, %v2082
      %v2111 = vadd.f32 %v2110, %v2086
      %v2112 = vadd.f32 %v2111, %v2090
      %v2113 = vrot.slane %v2112, 4
      %v2114 = vadd.f32 %v2112, %v2113
      %v2115 = vrot.slane %v2114, 2
      %v2116 = vadd.f32 %v2114, %v2115
      %v2117 = vrot.slane %v2116, 1
      %v2118 = vadd.f32 %v2116, %v2117
      %v2119 = vadd.f32 %v2079, %v2083
      %v2120 = vadd.f32 %v2119, %v2087
      %v2121 = vadd.f32 %v2120, %v2091
      %v2122 = vrot.slane %v2121, 4
      %v2123 = vadd.f32 %v2121, %v2122
      %v2124 = vrot.slane %v2123, 2
      %v2125 = vadd.f32 %v2123, %v2124
      %v2126 = vrot.slane %v2125, 1
      %v2127 = vadd.f32 %v2125, %v2126
      %2128 = vset.pattern.permute.xlu0 2
      %2129 = vperm.xlu0 %2128, %v1877
      %v2130 = vpop.permute.xlu0 %2129
      %v2132 = vadd.f32 %v2100, %v2130
      %v2133 = vadd.f32 %v2109, %v2130
      %v2134 = vadd.f32 %v2118, %v2130
      %v2135 = vadd.f32 %v2127, %v2130
      %v2140 = vcombine.low %v2132, %v2133
      %v2141 = vcombine.low %v2134, %v2135
      %v2143 = vunpack.c.l.s4 1966171168
      %v2144 = vunpack.c.0.s8 %v2143
      %v2145 = vlaneseq
      %v2146 = vshrl.u32 %v2145, 7
      %v2147 = vsub.s32 %v2144, %v2146
      %v2148 = vrot.slane %v2140, %v2147
      %v2150 = vunpack.c.l.s4 1966171168
      %v2151 = vunpack.c.0.s8 %v2150
      %v2152 = vlaneseq
      %v2153 = vshrl.u32 %v2152, 7
      %v2154 = vsub.s32 %v2151, %v2153
      %v2155 = vrot.slane %v2141, %v2154
      %v2156 = vcombine.low %v2148, %v2155
      %v2158 = vunpack.c.l.s4 1966171168
      %v2159 = vunpack.c.0.s8 %v2158
      %v2160 = vlaneseq
      %v2161 = vshrl.u32 %v2160, 7
      %v2162 = vsub.s32 %v2159, %v2161
      %v2163 = vrot.slane %v2156, %v2162
      %v2165 = vlaneseq
      %vm2166 = vcmp.ge.s32.totalorder %v2165, 0
      %vm2167 = vcmp.lt.s32.totalorder %v2165, 512
      %vm2168 = vmand %vm2166, %vm2167
      %2169 = vst.msk [vmem:[%s278] sm:$0xf] %vm2168, %v2163
      %s2170 = smul.u32 4, %s18
      %p2171 = scmp.lt.s32.totalorder %s2170, 7
      %s2172 = scalar_select %p2171, %s2170, 7
      %s2173 = scalar_lea.vmem %s7, %s2172
      // Predicated region
      $region49: #{tfcnn_forward.1} parent=47 // pred_check
        %p2174 = pneg %p188
      $region50: #{tfcnn_forward.1} parent=47 // pred_check_branch
        %2176 = sbr.rel (%p2174) target = $region52
      $region51: #{tfcnn_forward.1} parent=47 // pred_region
        %s2177 = smul.u32 4, %s18
      $region52: #{tfcnn_forward.1} parent=47 // pred_fallthru
        _
    $region48: #{tfcnn_forward.1} parent=5 // pred_fallthru
      _
    %p2178 = scmp.le.s32.totalorder 2, %s13
    // Predicated region
    $region53: #{tfcnn_forward.1} parent=5 // pred_check
      %p2179 = pneg %p2178
    $region54: #{tfcnn_forward.1} parent=5 // pred_check_branch
      %2181 = sbr.rel (%p2179) target = $region56
    $region55: #{tfcnn_forward.1} parent=5 // pred_region
      %s2182 = ssub.s32 %s13, 2
      // Predicated region
      $region57: #{tfcnn_forward.1} parent=55 // pred_check
        %p2183 = pneg %p194
      $region58: #{tfcnn_forward.1} parent=55 // pred_check_branch
        %2185 = sbr.rel (%p2183) target = $region60
      $region59: #{tfcnn_forward.1} parent=55 // pred_region
        %s2186 = smul.u32 4, %s19
        %p2187 = scmp.lt.s32.totalorder %s2186, 7
        %s2188 = scalar_select %p2187, %s2186, 7
        %s2189 = scalar_lea.vmem %s7, %s2188
      $region60: #{tfcnn_forward.1} parent=55 // pred_fallthru
        _
    $region56: #{tfcnn_forward.1} parent=5 // pred_fallthru
      _
  $region6: #{tfcnn_forward.1} parent=0 // loop_footer
    %s17 = sadd.s32 1, %s13
  $region7: #{tfcnn_forward.1} parent=0 // loop_footer_branch
    %12 = sbr.rel target = $region3
  $region8: #{tfcnn_forward.1} parent=0 // loop_exit
    _

</llo_original>
